<compile_context>
chip_gen: v7x
topology: tpu7x:2x2x1
jax: 0.10.0
libtpu: 0.0.40
codegen_flags: <defaults>
</compile_context>

<pallas_src>
import functools

import jax
import jax.numpy as jnp
from jax.experimental import pallas as pl
from jax.experimental.pallas import tpu as pltpu

_LANE = 128
_WEIGHT_BUFFERS = None  # lazily resolved: 1 if pl.Buffered(1) lowers + verifies, else 2


def _round_up(x, m):
    return ((x + m - 1) // m) * m


# ---------------------------------------------------------------------------
# Kernel
# ---------------------------------------------------------------------------
def _make_node_kernel(num_relu_layers):
    """Fused MLP kernel.

    Ref order:
      x_ref  (bf16, tile x in_dim)
      [W_i (bf16, in x out), b_i (f32, 1 x out)] * num_relu_layers   Linear + ReLU
      W_last (bf16, in x out_pad), b_last (f32, 1 x out_pad)          Linear (no ReLU)
      o_ref  (f32, tile x out_dim)   -- only the first out_dim lanes are stored
    """

    def kernel(x_ref, *refs):
        o_ref = refs[-1]
        params = refs[:-1]
        h = x_ref[...]                          # bf16 straight off the DMA
        idx = 0
        for _ in range(num_relu_layers):
            W = params[idx][...]                # bf16 (in, out)
            b = params[idx + 1][...]            # f32  (1, out)
            idx += 2
            y = jnp.dot(h, W, preferred_element_type=jnp.float32)
            h = jnp.maximum(y + b, 0.0).astype(jnp.bfloat16)   # f32 add/ReLU (v5e-safe)

        W = params[idx][...]                    # lane-padded fc3 weight
        b = params[idx + 1][...]
        y = jnp.dot(h, W, preferred_element_type=jnp.float32) + b
        # Store only the live output columns -> (B, output_dim) in HBM, no
        # 128-wide write amplification and no wrapper slice pass.
        o_ref[...] = y[:, : o_ref.shape[-1]].astype(o_ref.dtype)

    return kernel


# ---------------------------------------------------------------------------
# One-time parameter preparation (hoisted off the per-call path)
# ---------------------------------------------------------------------------
def prepare_params(params, *, tree_depth):
    """Turn the raw [W, b, ...] list (W already (in, out), f32) into a
    kernel-ready pytree.  Call once; reuse across forward calls.

    Layout of `params` (matching make_params / the PyTorch module):
      tree_depth x (W_hidden, b_hidden), (W_out, b_out),
      (W_fc1, b_fc1), (W_fc2, b_fc2), (W_fc3, b_fc3)
    """
    base = 2 * tree_depth
    hidden_params = params[:base]
    W_out, b_out = params[base], params[base + 1]
    W_fc1, b_fc1 = params[base + 2], params[base + 3]
    W_fc2, b_fc2 = params[base + 4], params[base + 5]
    W_fc3, b_fc3 = params[base + 6], params[base + 7]

    input_dim = hidden_params[0].shape[0]
    hidden = W_fc2.shape[0]
    output_dim = W_fc3.shape[1]

    # Fold the tree-output layer into fc1 (no nonlinearity between them):
    #   relu((x @ W_out + b_out) @ W_fc1 + b_fc1) == relu(x @ (W_out@W_fc1) + (b_out@W_fc1 + b_fc1))
    W_fused = W_out.astype(jnp.float32) @ W_fc1.astype(jnp.float32)          # (hidden, hidden)
    b_fused = b_out.astype(jnp.float32) @ W_fc1.astype(jnp.float32) + b_fc1  # (hidden,)

    def pad_w(W, rows, cols):
        W = W.astype(jnp.float32)
        return jnp.zeros((rows, cols), jnp.float32).at[: W.shape[0], : W.shape[1]].set(W)

    def pad_b(b, cols):
        b = b.astype(jnp.float32)
        return jnp.zeros((cols,), jnp.float32).at[: b.shape[0]].set(b)

    # Lane-pad the hidden width (free in vregs / MXU passes); the first
    # layer's input width stays = input_dim so x needs no column padding
    # (padding x would only add input HBM traffic on a memory-bound kernel).
    hp = _round_up(hidden, _LANE)
    # fc3 compute width is lane-padded too; only output_dim columns get stored.
    out_pad = _round_up(output_dim, _LANE)

    layers = []
    prev = input_dim
    for i in range(tree_depth):                         # tree hidden layers (ReLU)
        W, b = hidden_params[2 * i], hidden_params[2 * i + 1]
        layers.append((pad_w(W, prev, hp), pad_b(b, hp)))
        prev = hp
    layers.append((pad_w(W_fused, hp, hp), pad_b(b_fused, hp)))   # fused tree_out+fc1 (ReLU)
    layers.append((pad_w(W_fc2, hp, hp), pad_b(b_fc2, hp)))       # fc2 (ReLU)
    layers.append((pad_w(W_fc3, hp, out_pad), pad_b(b_fc3, out_pad)))  # fc3 (no ReLU)

    kernel_params = []
    for W, b in layers:
        kernel_params.append(W.astype(jnp.bfloat16))    # bf16 MXU operands
        kernel_params.append(b.reshape(1, -1))          # f32 (1, out) bias

    return {
        "kernel_params": [jax.device_put(p) for p in kernel_params],
        "num_relu_layers": tree_depth + 2,
        "input_dim": input_dim,
        "output_dim": output_dim,
    }


# ---------------------------------------------------------------------------
# Tiling / VMEM budgeting helpers
# ---------------------------------------------------------------------------
def _num_tensorcores():
    """2 for v7x (megacore-style 2 TCs per chip visible to one grid), else 1."""
    try:
        kind = jax.devices()[0].device_kind.lower()
    except Exception:
        return 1
    return 2 if ("v7" in kind or "7x" in kind) else 1


def _choose_batch_tiling(B, num_cores, max_tile_rows=2048):
    """Generation-aware batch tiling.

    * single-TC (v5e/v6e): one big block (grid==1) up to max_tile_rows; the
      grid is a serial loop there and each extra step costs ~0.35 us against
      sub-us of per-tile compute.
    * 2-TC (v7x): exact even split so each core gets one big block.
    * very large batches: roughly-equal tiles of <= max_tile_rows rows.
    Ragged batches are handled by padding B up to tile * n_tiles.
    """
    B8 = _round_up(max(B, 1), 8)
    n_tiles = num_cores if (num_cores >= 2 and B8 >= 32) else 1
    n_tiles = max(n_tiles, pl.cdiv(B8, max_tile_rows))
    gran = 16 if B8 >= 16 else 8            # keep bf16 sublane packing aligned
    tile = _round_up(pl.cdiv(B8, n_tiles), gran)
    return tile, tile * n_tiles


def _padded_vmem_bytes(shape, itemsize):
    if len(shape) == 1:
        r, c = 1, shape[0]
    else:
        r, c = shape[-2], shape[-1]
    sublane = {4: 8, 2: 16, 1: 32}.get(itemsize, 8)
    return _round_up(max(r, 1), sublane) * _round_up(max(c, 1), _LANE) * itemsize


def _vmem_limit_bytes(kernel_params, tile, in_dim, out_dim, weight_buffers):
    wbytes = sum(
        _padded_vmem_bytes(p.shape, p.dtype.itemsize) for p in kernel_params
    ) * weight_buffers
    xbytes = _padded_vmem_bytes((tile, in_dim), 2) * 2      # bf16 x, double-buffered
    obytes = _padded_vmem_bytes((tile, out_dim), 4) * 2     # f32 out, double-buffered
    need = wbytes + xbytes + obytes
    # 2x headroom for activations / compiler temporaries, 32 MiB floor.
    return int(max(2 * need + (8 << 20), 32 << 20))


# ---------------------------------------------------------------------------
# pallas_call wrapper
# ---------------------------------------------------------------------------
def _pallas_call(x_b, kernel_params, *, tile, out_dim, num_relu_layers, weight_buffers):
    B_pad, in_dim = x_b.shape
    kernel = _make_node_kernel(num_relu_layers)

    x_spec = pl.BlockSpec((tile, in_dim), lambda i: (i, 0))
    out_spec = pl.BlockSpec((tile, out_dim), lambda i: (i, 0))
    if weight_buffers == 1:
        # Resident weights: block index never changes -> single buffer saves VMEM.
        param_specs = [
            pl.BlockSpec(p.shape, lambda i: (0, 0), pipeline_mode=pl.Buffered(1))
            for p in kernel_params
        ]
    else:
        param_specs = [pl.BlockSpec(p.shape, lambda i: (0, 0)) for p in kernel_params]

    return pl.pallas_call(
        kernel,
        out_shape=jax.ShapeDtypeStruct((B_pad, out_dim), jnp.float32),
        grid_spec=pltpu.PrefetchScalarGridSpec(
            num_scalar_prefetch=0,
            grid=(B_pad // tile,),
            in_specs=[x_spec] + param_specs,
            out_specs=out_spec,
        ),
        compiler_params=pltpu.CompilerParams(
            dimension_semantics=("parallel",),
            vmem_limit_bytes=_vmem_limit_bytes(
                kernel_params, tile, in_dim, out_dim, weight_buffers
            ),
        ),
    )(x_b, *kernel_params)


def _resolve_weight_buffers_and_run(call):
    """Try single-buffered resident weights; fall back to the default
    double-buffered path if pl.Buffered(1) does not lower (or mismatches),
    and cache the decision for the process."""
    global _WEIGHT_BUFFERS
    if _WEIGHT_BUFFERS is not None:
        return call(weight_buffers=_WEIGHT_BUFFERS)
    try:
        out1 = call(weight_buffers=1)
        out2 = call(weight_buffers=2)
        if bool(jnp.allclose(out1, out2, atol=1e-3, rtol=1e-3)):
            _WEIGHT_BUFFERS = 1
            return out1
        _WEIGHT_BUFFERS = 2
        return out2
    except Exception:
        _WEIGHT_BUFFERS = 2
        return call(weight_buffers=2)


def node_classifier_forward(x, prepared, *, batch_tile=None, num_cores=None,
                            max_tile_rows=2048, weight_buffers=None):
    """Forward pass.  `prepared` is the output of prepare_params()."""
    kernel_params = prepared["kernel_params"]
    num_relu_layers = prepared["num_relu_layers"]
    out_dim = prepared["output_dim"]

    B, in_dim = x.shape
    assert in_dim == prepared["input_dim"], "input feature width mismatch"

    if num_cores is None:
        num_cores = _num_tensorcores()
    if batch_tile is None:
        tile, B_pad = _choose_batch_tiling(B, num_cores, max_tile_rows)
    else:
        tile = batch_tile
        B_pad = _round_up(B, tile)

    # bf16 input DMA (the kernel's MXU operands are bf16 anyway); zero-pad
    # ragged batches up to the tile so pipelining / megacore split still work.
    x_b = x.astype(jnp.bfloat16)
    if B_pad != B:
        x_b = jnp.zeros((B_pad, in_dim), jnp.bfloat16).at[:B, :].set(x_b)

    call = functools.partial(
        _pallas_call, x_b, kernel_params,
        tile=tile, out_dim=out_dim, num_relu_layers=num_relu_layers,
    )
    if weight_buffers is None:
        out = _resolve_weight_buffers_and_run(call)
    else:
        out = call(weight_buffers=weight_buffers)

    return out[:B] if B_pad != B else out


# ---------------------------------------------------------------------------
# Parameter construction + pure-JAX reference (for the self-test)
# ---------------------------------------------------------------------------
def _init_linear(key, in_features, out_features):
    """nn.Linear-style U(-1/sqrt(in), 1/sqrt(in)); W returned as (in, out)."""
    kw, kb = jax.random.split(key)
    bound = 1.0 / jnp.sqrt(jnp.float32(in_features))
    W = jax.random.uniform(kw, (in_features, out_features), jnp.float32,
                           minval=-bound, maxval=bound)
    b = jax.random.uniform(kb, (out_features,), jnp.float32,
                           minval=-bound, maxval=bound)
    return W, b


def make_params(key, input_dim, output_dim, num_trees, tree_depth, hidden_dim):
    params = []
    in_dim = input_dim
    for _ in range(tree_depth):                      # tree hidden layers
        key, sub = jax.random.split(key)
        W, b = _init_linear(sub, in_dim, hidden_dim)
        params += [W, b]
        in_dim = hidden_dim
    key, sub = jax.random.split(key)                 # tree output layer
    W, b = _init_linear(sub, hidden_dim, num_trees)
    params += [W, b]
    key, sub = jax.random.split(key)                 # fc1
    W, b = _init_linear(sub, num_trees, hidden_dim)
    params += [W, b]
    key, sub = jax.random.split(key)                 # fc2
    W, b = _init_linear(sub, hidden_dim, hidden_dim)
    params += [W, b]
    key, sub = jax.random.split(key)                 # fc3
    W, b = _init_linear(sub, hidden_dim, output_dim)
    params += [W, b]
    return params


def reference_forward(x, params, tree_depth):
    """Pure-JAX f32 reference mirroring the PyTorch module semantics (unfused)."""
    h = x
    idx = 0
    for _ in range(tree_depth):
        h = jnp.maximum(h @ params[idx] + params[idx + 1], 0.0)
        idx += 2
    h = h @ params[idx] + params[idx + 1]            # tree output layer (no ReLU)
    idx += 2
    for _ in range(2):                               # fc1, fc2
        h = jnp.maximum(h @ params[idx] + params[idx + 1], 0.0)
        idx += 2
    h = h @ params[idx] + params[idx + 1]            # fc3
    return h


if __name__ == "__main__":
    # Small shapes consistent with the module's constructor.
    input_dim = 16
    output_dim = 4
    num_trees = 8
    tree_depth = 2
    hidden_dim = 32
    batch = 128

    key = jax.random.PRNGKey(0)
    key, xkey, pkey = jax.random.split(key, 3)

    x = jax.random.normal(xkey, (batch, input_dim), jnp.float32)
    params = make_params(pkey, input_dim, output_dim, num_trees, tree_depth, hidden_dim)

    # One-time, off the hot path: fold, pad, cast, reshape.
    prepared = prepare_params(params, tree_depth=tree_depth)

    out = node_classifier_forward(x, prepared)
    out = jax.block_until_ready(out)

    ref = reference_forward(x, params, tree_depth)
    assert out.shape == (batch, output_dim)
    # bf16 MXU operands (f32 accumulation) -> relaxed tolerance vs f32 reference.
    assert jnp.allclose(out, ref, atol=5e-2, rtol=5e-2), "mismatch vs JAX reference"

    print("KERNEL_OK")
</pallas_src>

<mosaic_0001>
module attributes {stable_mosaic.version = 11 : i64} {
  func.func @kernel(%arg0: i32, %arg1: memref<128x16xbf16, #tpu.memory_space<vmem>>, %arg2: memref<16x128xbf16, #tpu.memory_space<vmem>>, %arg3: memref<1x128xf32, #tpu.memory_space<vmem>>, %arg4: memref<128x128xbf16, #tpu.memory_space<vmem>>, %arg5: memref<1x128xf32, #tpu.memory_space<vmem>>, %arg6: memref<128x128xbf16, #tpu.memory_space<vmem>>, %arg7: memref<1x128xf32, #tpu.memory_space<vmem>>, %arg8: memref<128x128xbf16, #tpu.memory_space<vmem>>, %arg9: memref<1x128xf32, #tpu.memory_space<vmem>>, %arg10: memref<128x128xbf16, #tpu.memory_space<vmem>>, %arg11: memref<1x128xf32, #tpu.memory_space<vmem>>, %arg12: memref<128x4xf32, #tpu.memory_space<vmem>>) attributes {dimension_semantics = [#tpu.dimension_semantics<parallel>], iteration_bounds = array<i64: 1>, scalar_prefetch = 0 : i64, scratch_operands = 0 : i64, tpu.core_type = #tpu.core_type<tc>, window_params = [{transform_indices = @transform_0, window_bounds = array<i64: 128, 16>}, {pipeline_mode = #tpu.pipeline_mode<synchronous>, transform_indices = @transform_1, window_bounds = array<i64: 16, 128>}, {pipeline_mode = #tpu.pipeline_mode<synchronous>, transform_indices = @transform_2, window_bounds = array<i64: 1, 128>}, {pipeline_mode = #tpu.pipeline_mode<synchronous>, transform_indices = @transform_3, window_bounds = array<i64: 128, 128>}, {pipeline_mode = #tpu.pipeline_mode<synchronous>, transform_indices = @transform_4, window_bounds = array<i64: 1, 128>}, {pipeline_mode = #tpu.pipeline_mode<synchronous>, transform_indices = @transform_5, window_bounds = array<i64: 128, 128>}, {pipeline_mode = #tpu.pipeline_mode<synchronous>, transform_indices = @transform_6, window_bounds = array<i64: 1, 128>}, {pipeline_mode = #tpu.pipeline_mode<synchronous>, transform_indices = @transform_7, window_bounds = array<i64: 128, 128>}, {pipeline_mode = #tpu.pipeline_mode<synchronous>, transform_indices = @transform_8, window_bounds = array<i64: 1, 128>}, {pipeline_mode = #tpu.pipeline_mode<synchronous>, transform_indices = @transform_9, window_bounds = array<i64: 128, 128>}, {pipeline_mode = #tpu.pipeline_mode<synchronous>, transform_indices = @transform_10, window_bounds = array<i64: 1, 128>}, {transform_indices = @transform_11, window_bounds = array<i64: 128, 4>}]} {
    %c0 = arith.constant 0 : index
    %c0_0 = arith.constant 0 : index
    %0 = vector.load %arg1[%c0, %c0_0] : memref<128x16xbf16, #tpu.memory_space<vmem>>, vector<128x16xbf16>
    %c0_1 = arith.constant 0 : index
    %c0_2 = arith.constant 0 : index
    %1 = vector.load %arg2[%c0_1, %c0_2] : memref<16x128xbf16, #tpu.memory_space<vmem>>, vector<16x128xbf16>
    %c0_3 = arith.constant 0 : index
    %c0_4 = arith.constant 0 : index
    %2 = vector.load %arg3[%c0_3, %c0_4] : memref<1x128xf32, #tpu.memory_space<vmem>>, vector<1x128xf32>
    %cst = arith.constant dense<0.000000e+00> : vector<128x128xf32>
    %3 = tpu.matmul %0, %1, %cst {dimension_numbers = #tpu.dot_dimension_numbers<[1], [0], [0], [1], [0, 0, 1, 1], [], []>} : vector<128x16xbf16>, vector<16x128xbf16>, vector<128x128xf32> -> vector<128x128xf32>
    %4 = vector.broadcast %2 : vector<1x128xf32> to vector<128x128xf32>
    %5 = arith.addf %3, %4 : vector<128x128xf32>
    %cst_5 = arith.constant 0.000000e+00 : f32
    %6 = vector.broadcast %cst_5 : f32 to vector<128x128xf32>
    %7 = arith.maximumf %5, %6 : vector<128x128xf32>
    %8 = arith.truncf %7 : vector<128x128xf32> to vector<128x128xbf16>
    %c0_6 = arith.constant 0 : index
    %c0_7 = arith.constant 0 : index
    %9 = vector.load %arg4[%c0_6, %c0_7] : memref<128x128xbf16, #tpu.memory_space<vmem>>, vector<128x128xbf16>
    %c0_8 = arith.constant 0 : index
    %c0_9 = arith.constant 0 : index
    %10 = vector.load %arg5[%c0_8, %c0_9] : memref<1x128xf32, #tpu.memory_space<vmem>>, vector<1x128xf32>
    %cst_10 = arith.constant dense<0.000000e+00> : vector<128x128xf32>
    %11 = tpu.matmul %8, %9, %cst_10 {dimension_numbers = #tpu.dot_dimension_numbers<[1], [0], [0], [1], [0, 0, 1, 1], [], []>} : vector<128x128xbf16>, vector<128x128xbf16>, vector<128x128xf32> -> vector<128x128xf32>
    %12 = vector.broadcast %10 : vector<1x128xf32> to vector<128x128xf32>
    %13 = arith.addf %11, %12 : vector<128x128xf32>
    %cst_11 = arith.constant 0.000000e+00 : f32
    %14 = vector.broadcast %cst_11 : f32 to vector<128x128xf32>
    %15 = arith.maximumf %13, %14 : vector<128x128xf32>
    %16 = arith.truncf %15 : vector<128x128xf32> to vector<128x128xbf16>
    %c0_12 = arith.constant 0 : index
    %c0_13 = arith.constant 0 : index
    %17 = vector.load %arg6[%c0_12, %c0_13] : memref<128x128xbf16, #tpu.memory_space<vmem>>, vector<128x128xbf16>
    %c0_14 = arith.constant 0 : index
    %c0_15 = arith.constant 0 : index
    %18 = vector.load %arg7[%c0_14, %c0_15] : memref<1x128xf32, #tpu.memory_space<vmem>>, vector<1x128xf32>
    %cst_16 = arith.constant dense<0.000000e+00> : vector<128x128xf32>
    %19 = tpu.matmul %16, %17, %cst_16 {dimension_numbers = #tpu.dot_dimension_numbers<[1], [0], [0], [1], [0, 0, 1, 1], [], []>} : vector<128x128xbf16>, vector<128x128xbf16>, vector<128x128xf32> -> vector<128x128xf32>
    %20 = vector.broadcast %18 : vector<1x128xf32> to vector<128x128xf32>
    %21 = arith.addf %19, %20 : vector<128x128xf32>
    %cst_17 = arith.constant 0.000000e+00 : f32
    %22 = vector.broadcast %cst_17 : f32 to vector<128x128xf32>
    %23 = arith.maximumf %21, %22 : vector<128x128xf32>
    %24 = arith.truncf %23 : vector<128x128xf32> to vector<128x128xbf16>
    %c0_18 = arith.constant 0 : index
    %c0_19 = arith.constant 0 : index
    %25 = vector.load %arg8[%c0_18, %c0_19] : memref<128x128xbf16, #tpu.memory_space<vmem>>, vector<128x128xbf16>
    %c0_20 = arith.constant 0 : index
    %c0_21 = arith.constant 0 : index
    %26 = vector.load %arg9[%c0_20, %c0_21] : memref<1x128xf32, #tpu.memory_space<vmem>>, vector<1x128xf32>
    %cst_22 = arith.constant dense<0.000000e+00> : vector<128x128xf32>
    %27 = tpu.matmul %24, %25, %cst_22 {dimension_numbers = #tpu.dot_dimension_numbers<[1], [0], [0], [1], [0, 0, 1, 1], [], []>} : vector<128x128xbf16>, vector<128x128xbf16>, vector<128x128xf32> -> vector<128x128xf32>
    %28 = vector.broadcast %26 : vector<1x128xf32> to vector<128x128xf32>
    %29 = arith.addf %27, %28 : vector<128x128xf32>
    %cst_23 = arith.constant 0.000000e+00 : f32
    %30 = vector.broadcast %cst_23 : f32 to vector<128x128xf32>
    %31 = arith.maximumf %29, %30 : vector<128x128xf32>
    %32 = arith.truncf %31 : vector<128x128xf32> to vector<128x128xbf16>
    %c0_24 = arith.constant 0 : index
    %c0_25 = arith.constant 0 : index
    %33 = vector.load %arg10[%c0_24, %c0_25] : memref<128x128xbf16, #tpu.memory_space<vmem>>, vector<128x128xbf16>
    %c0_26 = arith.constant 0 : index
    %c0_27 = arith.constant 0 : index
    %34 = vector.load %arg11[%c0_26, %c0_27] : memref<1x128xf32, #tpu.memory_space<vmem>>, vector<1x128xf32>
    %cst_28 = arith.constant dense<0.000000e+00> : vector<128x128xf32>
    %35 = tpu.matmul %32, %33, %cst_28 {dimension_numbers = #tpu.dot_dimension_numbers<[1], [0], [0], [1], [0, 0, 1, 1], [], []>} : vector<128x128xbf16>, vector<128x128xbf16>, vector<128x128xf32> -> vector<128x128xf32>
    %36 = vector.broadcast %34 : vector<1x128xf32> to vector<128x128xf32>
    %37 = arith.addf %35, %36 : vector<128x128xf32>
    %38 = vector.extract_strided_slice %37 {offsets = [0, 0], sizes = [128, 4], strides = [1, 1]} : vector<128x128xf32> to vector<128x4xf32>
    %c0_29 = arith.constant 0 : index
    %c0_30 = arith.constant 0 : index
    %39 = vector.load %arg12[%c0_29, %c0_30] : memref<128x4xf32, #tpu.memory_space<vmem>>, vector<128x4xf32>
    tpu.vector_store %arg12[%c0_29, %c0_30], %38 {strides = array<i32>} : memref<128x4xf32, #tpu.memory_space<vmem>>, vector<128x4xf32>,
    return
  }
  func.func @transform_0(%arg0: i32) -> (i32, i32) {
    %c0_i32 = arith.constant 0 : i32
    %c0_i32_0 = arith.constant 0 : i32
    return %arg0, %c0_i32 : i32, i32
  }
  func.func @transform_1(%arg0: i32) -> (i32, i32) {
    %c0_i32 = arith.constant 0 : i32
    %c0_i32_0 = arith.constant 0 : i32
    %c0_i32_1 = arith.constant 0 : i32
    return %c0_i32, %c0_i32_0 : i32, i32
  }
  func.func @transform_2(%arg0: i32) -> (i32, i32) {
    %c0_i32 = arith.constant 0 : i32
    %c0_i32_0 = arith.constant 0 : i32
    %c0_i32_1 = arith.constant 0 : i32
    return %c0_i32, %c0_i32_0 : i32, i32
  }
  func.func @transform_3(%arg0: i32) -> (i32, i32) {
    %c0_i32 = arith.constant 0 : i32
    %c0_i32_0 = arith.constant 0 : i32
    %c0_i32_1 = arith.constant 0 : i32
    return %c0_i32, %c0_i32_0 : i32, i32
  }
  func.func @transform_4(%arg0: i32) -> (i32, i32) {
    %c0_i32 = arith.constant 0 : i32
    %c0_i32_0 = arith.constant 0 : i32
    %c0_i32_1 = arith.constant 0 : i32
    return %c0_i32, %c0_i32_0 : i32, i32
  }
  func.func @transform_5(%arg0: i32) -> (i32, i32) {
    %c0_i32 = arith.constant 0 : i32
    %c0_i32_0 = arith.constant 0 : i32
    %c0_i32_1 = arith.constant 0 : i32
    return %c0_i32, %c0_i32_0 : i32, i32
  }
  func.func @transform_6(%arg0: i32) -> (i32, i32) {
    %c0_i32 = arith.constant 0 : i32
    %c0_i32_0 = arith.constant 0 : i32
    %c0_i32_1 = arith.constant 0 : i32
    return %c0_i32, %c0_i32_0 : i32, i32
  }
  func.func @transform_7(%arg0: i32) -> (i32, i32) {
    %c0_i32 = arith.constant 0 : i32
    %c0_i32_0 = arith.constant 0 : i32
    %c0_i32_1 = arith.constant 0 : i32
    return %c0_i32, %c0_i32_0 : i32, i32
  }
  func.func @transform_8(%arg0: i32) -> (i32, i32) {
    %c0_i32 = arith.constant 0 : i32
    %c0_i32_0 = arith.constant 0 : i32
    %c0_i32_1 = arith.constant 0 : i32
    return %c0_i32, %c0_i32_0 : i32, i32
  }
  func.func @transform_9(%arg0: i32) -> (i32, i32) {
    %c0_i32 = arith.constant 0 : i32
    %c0_i32_0 = arith.constant 0 : i32
    %c0_i32_1 = arith.constant 0 : i32
    return %c0_i32, %c0_i32_0 : i32, i32
  }
  func.func @transform_10(%arg0: i32) -> (i32, i32) {
    %c0_i32 = arith.constant 0 : i32
    %c0_i32_0 = arith.constant 0 : i32
    %c0_i32_1 = arith.constant 0 : i32
    return %c0_i32, %c0_i32_0 : i32, i32
  }
  func.func @transform_11(%arg0: i32) -> (i32, i32) {
    %c0_i32 = arith.constant 0 : i32
    %c0_i32_0 = arith.constant 0 : i32
    return %arg0, %c0_i32 : i32, i32
  }
}

module attributes {stable_mosaic.version = 11 : i64} {
  func.func @kernel(%arg0: i32, %arg1: memref<128x16xbf16, #tpu.memory_space<vmem>>, %arg2: memref<16x128xbf16, #tpu.memory_space<vmem>>, %arg3: memref<1x128xf32, #tpu.memory_space<vmem>>, %arg4: memref<128x128xbf16, #tpu.memory_space<vmem>>, %arg5: memref<1x128xf32, #tpu.memory_space<vmem>>, %arg6: memref<128x128xbf16, #tpu.memory_space<vmem>>, %arg7: memref<1x128xf32, #tpu.memory_space<vmem>>, %arg8: memref<128x128xbf16, #tpu.memory_space<vmem>>, %arg9: memref<1x128xf32, #tpu.memory_space<vmem>>, %arg10: memref<128x128xbf16, #tpu.memory_space<vmem>>, %arg11: memref<1x128xf32, #tpu.memory_space<vmem>>, %arg12: memref<128x4xf32, #tpu.memory_space<vmem>>) attributes {dimension_semantics = [#tpu.dimension_semantics<parallel>], iteration_bounds = array<i64: 1>, scalar_prefetch = 0 : i64, scratch_operands = 0 : i64, tpu.core_type = #tpu.core_type<tc>, window_params = [{transform_indices = @transform_0, window_bounds = array<i64: 128, 16>}, {pipeline_mode = #tpu.pipeline_mode<synchronous>, transform_indices = @transform_1, window_bounds = array<i64: 16, 128>}, {pipeline_mode = #tpu.pipeline_mode<synchronous>, transform_indices = @transform_2, window_bounds = array<i64: 1, 128>}, {pipeline_mode = #tpu.pipeline_mode<synchronous>, transform_indices = @transform_3, window_bounds = array<i64: 128, 128>}, {pipeline_mode = #tpu.pipeline_mode<synchronous>, transform_indices = @transform_4, window_bounds = array<i64: 1, 128>}, {pipeline_mode = #tpu.pipeline_mode<synchronous>, transform_indices = @transform_5, window_bounds = array<i64: 128, 128>}, {pipeline_mode = #tpu.pipeline_mode<synchronous>, transform_indices = @transform_6, window_bounds = array<i64: 1, 128>}, {pipeline_mode = #tpu.pipeline_mode<synchronous>, transform_indices = @transform_7, window_bounds = array<i64: 128, 128>}, {pipeline_mode = #tpu.pipeline_mode<synchronous>, transform_indices = @transform_8, window_bounds = array<i64: 1, 128>}, {pipeline_mode = #tpu.pipeline_mode<synchronous>, transform_indices = @transform_9, window_bounds = array<i64: 128, 128>}, {pipeline_mode = #tpu.pipeline_mode<synchronous>, transform_indices = @transform_10, window_bounds = array<i64: 1, 128>}, {transform_indices = @transform_11, window_bounds = array<i64: 128, 4>}]} {
    %c0 = arith.constant 0 : index
    %c0_0 = arith.constant 0 : index
    %0 = vector.load %arg1[%c0, %c0_0] : memref<128x16xbf16, #tpu.memory_space<vmem>>, vector<128x16xbf16>
    %c0_1 = arith.constant 0 : index
    %c0_2 = arith.constant 0 : index
    %1 = vector.load %arg2[%c0_1, %c0_2] : memref<16x128xbf16, #tpu.memory_space<vmem>>, vector<16x128xbf16>
    %c0_3 = arith.constant 0 : index
    %c0_4 = arith.constant 0 : index
    %2 = vector.load %arg3[%c0_3, %c0_4] : memref<1x128xf32, #tpu.memory_space<vmem>>, vector<1x128xf32>
    %cst = arith.constant dense<0.000000e+00> : vector<128x128xf32>
    %3 = tpu.matmul %0, %1, %cst {dimension_numbers = #tpu.dot_dimension_numbers<[1], [0], [0], [1], [0, 0, 1, 1], [], []>} : vector<128x16xbf16>, vector<16x128xbf16>, vector<128x128xf32> -> vector<128x128xf32>
    %4 = vector.broadcast %2 : vector<1x128xf32> to vector<128x128xf32>
    %5 = arith.addf %3, %4 : vector<128x128xf32>
    %cst_5 = arith.constant 0.000000e+00 : f32
    %6 = vector.broadcast %cst_5 : f32 to vector<128x128xf32>
    %7 = arith.maximumf %5, %6 : vector<128x128xf32>
    %8 = arith.truncf %7 : vector<128x128xf32> to vector<128x128xbf16>
    %c0_6 = arith.constant 0 : index
    %c0_7 = arith.constant 0 : index
    %9 = vector.load %arg4[%c0_6, %c0_7] : memref<128x128xbf16, #tpu.memory_space<vmem>>, vector<128x128xbf16>
    %c0_8 = arith.constant 0 : index
    %c0_9 = arith.constant 0 : index
    %10 = vector.load %arg5[%c0_8, %c0_9] : memref<1x128xf32, #tpu.memory_space<vmem>>, vector<1x128xf32>
    %cst_10 = arith.constant dense<0.000000e+00> : vector<128x128xf32>
    %11 = tpu.matmul %8, %9, %cst_10 {dimension_numbers = #tpu.dot_dimension_numbers<[1], [0], [0], [1], [0, 0, 1, 1], [], []>} : vector<128x128xbf16>, vector<128x128xbf16>, vector<128x128xf32> -> vector<128x128xf32>
    %12 = vector.broadcast %10 : vector<1x128xf32> to vector<128x128xf32>
    %13 = arith.addf %11, %12 : vector<128x128xf32>
    %cst_11 = arith.constant 0.000000e+00 : f32
    %14 = vector.broadcast %cst_11 : f32 to vector<128x128xf32>
    %15 = arith.maximumf %13, %14 : vector<128x128xf32>
    %16 = arith.truncf %15 : vector<128x128xf32> to vector<128x128xbf16>
    %c0_12 = arith.constant 0 : index
    %c0_13 = arith.constant 0 : index
    %17 = vector.load %arg6[%c0_12, %c0_13] : memref<128x128xbf16, #tpu.memory_space<vmem>>, vector<128x128xbf16>
    %c0_14 = arith.constant 0 : index
    %c0_15 = arith.constant 0 : index
    %18 = vector.load %arg7[%c0_14, %c0_15] : memref<1x128xf32, #tpu.memory_space<vmem>>, vector<1x128xf32>
    %cst_16 = arith.constant dense<0.000000e+00> : vector<128x128xf32>
    %19 = tpu.matmul %16, %17, %cst_16 {dimension_numbers = #tpu.dot_dimension_numbers<[1], [0], [0], [1], [0, 0, 1, 1], [], []>} : vector<128x128xbf16>, vector<128x128xbf16>, vector<128x128xf32> -> vector<128x128xf32>
    %20 = vector.broadcast %18 : vector<1x128xf32> to vector<128x128xf32>
    %21 = arith.addf %19, %20 : vector<128x128xf32>
    %cst_17 = arith.constant 0.000000e+00 : f32
    %22 = vector.broadcast %cst_17 : f32 to vector<128x128xf32>
    %23 = arith.maximumf %21, %22 : vector<128x128xf32>
    %24 = arith.truncf %23 : vector<128x128xf32> to vector<128x128xbf16>
    %c0_18 = arith.constant 0 : index
    %c0_19 = arith.constant 0 : index
    %25 = vector.load %arg8[%c0_18, %c0_19] : memref<128x128xbf16, #tpu.memory_space<vmem>>, vector<128x128xbf16>
    %c0_20 = arith.constant 0 : index
    %c0_21 = arith.constant 0 : index
    %26 = vector.load %arg9[%c0_20, %c0_21] : memref<1x128xf32, #tpu.memory_space<vmem>>, vector<1x128xf32>
    %cst_22 = arith.constant dense<0.000000e+00> : vector<128x128xf32>
    %27 = tpu.matmul %24, %25, %cst_22 {dimension_numbers = #tpu.dot_dimension_numbers<[1], [0], [0], [1], [0, 0, 1, 1], [], []>} : vector<128x128xbf16>, vector<128x128xbf16>, vector<128x128xf32> -> vector<128x128xf32>
    %28 = vector.broadcast %26 : vector<1x128xf32> to vector<128x128xf32>
    %29 = arith.addf %27, %28 : vector<128x128xf32>
    %cst_23 = arith.constant 0.000000e+00 : f32
    %30 = vector.broadcast %cst_23 : f32 to vector<128x128xf32>
    %31 = arith.maximumf %29, %30 : vector<128x128xf32>
    %32 = arith.truncf %31 : vector<128x128xf32> to vector<128x128xbf16>
    %c0_24 = arith.constant 0 : index
    %c0_25 = arith.constant 0 : index
    %33 = vector.load %arg10[%c0_24, %c0_25] : memref<128x128xbf16, #tpu.memory_space<vmem>>, vector<128x128xbf16>
    %c0_26 = arith.constant 0 : index
    %c0_27 = arith.constant 0 : index
    %34 = vector.load %arg11[%c0_26, %c0_27] : memref<1x128xf32, #tpu.memory_space<vmem>>, vector<1x128xf32>
    %cst_28 = arith.constant dense<0.000000e+00> : vector<128x128xf32>
    %35 = tpu.matmul %32, %33, %cst_28 {dimension_numbers = #tpu.dot_dimension_numbers<[1], [0], [0], [1], [0, 0, 1, 1], [], []>} : vector<128x128xbf16>, vector<128x128xbf16>, vector<128x128xf32> -> vector<128x128xf32>
    %36 = vector.broadcast %34 : vector<1x128xf32> to vector<128x128xf32>
    %37 = arith.addf %35, %36 : vector<128x128xf32>
    %38 = vector.extract_strided_slice %37 {offsets = [0, 0], sizes = [128, 4], strides = [1, 1]} : vector<128x128xf32> to vector<128x4xf32>
    %c0_29 = arith.constant 0 : index
    %c0_30 = arith.constant 0 : index
    %39 = vector.load %arg12[%c0_29, %c0_30] : memref<128x4xf32, #tpu.memory_space<vmem>>, vector<128x4xf32>
    tpu.vector_store %arg12[%c0_29, %c0_30], %38 {strides = array<i32>} : memref<128x4xf32, #tpu.memory_space<vmem>>, vector<128x4xf32>,
    return
  }
  func.func @transform_0(%arg0: i32) -> (i32, i32) {
    %c0_i32 = arith.constant 0 : i32
    %c0_i32_0 = arith.constant 0 : i32
    return %arg0, %c0_i32 : i32, i32
  }
  func.func @transform_1(%arg0: i32) -> (i32, i32) {
    %c0_i32 = arith.constant 0 : i32
    %c0_i32_0 = arith.constant 0 : i32
    %c0_i32_1 = arith.constant 0 : i32
    return %c0_i32, %c0_i32_0 : i32, i32
  }
  func.func @transform_2(%arg0: i32) -> (i32, i32) {
    %c0_i32 = arith.constant 0 : i32
    %c0_i32_0 = arith.constant 0 : i32
    %c0_i32_1 = arith.constant 0 : i32
    return %c0_i32, %c0_i32_0 : i32, i32
  }
  func.func @transform_3(%arg0: i32) -> (i32, i32) {
    %c0_i32 = arith.constant 0 : i32
    %c0_i32_0 = arith.constant 0 : i32
    %c0_i32_1 = arith.constant 0 : i32
    return %c0_i32, %c0_i32_0 : i32, i32
  }
  func.func @transform_4(%arg0: i32) -> (i32, i32) {
    %c0_i32 = arith.constant 0 : i32
    %c0_i32_0 = arith.constant 0 : i32
    %c0_i32_1 = arith.constant 0 : i32
    return %c0_i32, %c0_i32_0 : i32, i32
  }
  func.func @transform_5(%arg0: i32) -> (i32, i32) {
    %c0_i32 = arith.constant 0 : i32
    %c0_i32_0 = arith.constant 0 : i32
    %c0_i32_1 = arith.constant 0 : i32
    return %c0_i32, %c0_i32_0 : i32, i32
  }
  func.func @transform_6(%arg0: i32) -> (i32, i32) {
    %c0_i32 = arith.constant 0 : i32
    %c0_i32_0 = arith.constant 0 : i32
    %c0_i32_1 = arith.constant 0 : i32
    return %c0_i32, %c0_i32_0 : i32, i32
  }
  func.func @transform_7(%arg0: i32) -> (i32, i32) {
    %c0_i32 = arith.constant 0 : i32
    %c0_i32_0 = arith.constant 0 : i32
    %c0_i32_1 = arith.constant 0 : i32
    return %c0_i32, %c0_i32_0 : i32, i32
  }
  func.func @transform_8(%arg0: i32) -> (i32, i32) {
    %c0_i32 = arith.constant 0 : i32
    %c0_i32_0 = arith.constant 0 : i32
    %c0_i32_1 = arith.constant 0 : i32
    return %c0_i32, %c0_i32_0 : i32, i32
  }
  func.func @transform_9(%arg0: i32) -> (i32, i32) {
    %c0_i32 = arith.constant 0 : i32
    %c0_i32_0 = arith.constant 0 : i32
    %c0_i32_1 = arith.constant 0 : i32
    return %c0_i32, %c0_i32_0 : i32, i32
  }
  func.func @transform_10(%arg0: i32) -> (i32, i32) {
    %c0_i32 = arith.constant 0 : i32
    %c0_i32_0 = arith.constant 0 : i32
    %c0_i32_1 = arith.constant 0 : i32
    return %c0_i32, %c0_i32_0 : i32, i32
  }
  func.func @transform_11(%arg0: i32) -> (i32, i32) {
    %c0_i32 = arith.constant 0 : i32
    %c0_i32_0 = arith.constant 0 : i32
    return %arg0, %c0_i32 : i32, i32
  }
}

</mosaic_0001>

<llo_original>
// kernel: tpu_custom_call.1
$region0: #{tpu_custom_call.1}
  #allocation0 [shape = 'u32[]', space=smem, size = 0x4, offset = 0x4, fixed_abs, tag = 'smem constant byte address 0x4 - core index']
  #allocation1 [shape = 'u32[144,128]{1,0:T(1,128)}', space=vmem, size = 0x12000, scoped, tag = 'internal scratch']
  %s0 = inlined_call_operand.vmem [shape: bf16[128,16], index: 0, kind: input, shape index: {}]
  %s1 = inlined_call_operand.vmem [shape: bf16[16,128], index: 1, kind: input, shape index: {}]
  %s2 = inlined_call_operand.vmem [shape: f32[1,128], index: 2, kind: input, shape index: {}]
  %s3 = inlined_call_operand.vmem [shape: bf16[128,128], index: 3, kind: input, shape index: {}]
  %s4 = inlined_call_operand.vmem [shape: f32[1,128], index: 4, kind: input, shape index: {}]
  %s5 = inlined_call_operand.hbm [shape: bf16[128,128], index: 5, kind: input, shape index: {}]
  %s6 = inlined_call_operand.vmem [shape: f32[1,128], index: 6, kind: input, shape index: {}]
  %s7 = inlined_call_operand.hbm [shape: bf16[128,128], index: 7, kind: input, shape index: {}]
  %s8 = inlined_call_operand.vmem [shape: f32[1,128], index: 8, kind: input, shape index: {}]
  %s9 = inlined_call_operand.hbm [shape: bf16[128,128], index: 9, kind: input, shape index: {}]
  %s10 = inlined_call_operand.vmem [shape: f32[1,128], index: 10, kind: input, shape index: {}]
  %s11 = inlined_call_operand.vmem [shape: f32[128,4], index: 11, kind: output, shape index: {}]
  %s12 = sld [smem:[#allocation0]]
  $region66: #{tpu_custom_call.1} parent=0
    _
  %s14 = ssub.s32 1, %s12
  %s15 = scalar_select 0, %s14, %s12
  $region1: #{tpu_custom_call.1} parent=0
    #allocation2 [shape = 'u8[32768]{0}', space=vmem, size = 0x8000, scoped, tag = 'input window, operand 5, single buffered']
    #allocation3 [shape = 's32[1]{0}', space=sflag, size = 0x4, scoped, tag = 'scoped memory for tpu_custom_call.1']
    #allocation4 [shape = 'u8[32768]{0}', space=vmem, size = 0x8000, scoped, tag = 'input window, operand 7, single buffered']
    #allocation5 [shape = 's32[1]{0}', space=sflag, size = 0x4, scoped, tag = 'scoped memory for tpu_custom_call.1']
    #allocation6 [shape = 'u8[32768]{0}', space=vmem, size = 0x8000, scoped, tag = 'input window, operand 9, single buffered']
    %16 = vsyncpa [#allocation3], 0
    %17 = vsyncpa [#allocation5], 0
    // Predicated region
    $region2: #{tpu_custom_call.1} parent=1 // pred_check
      _
    $region3: #{tpu_custom_call.1} parent=1 // pred_check_branch
      %19 = sbr.rel (0) target = $region5
    $region4: #{tpu_custom_call.1} parent=1 // pred_region
      _
    $region5: #{tpu_custom_call.1} parent=1 // pred_fallthru
      _
    // Predicated region
    $region6: #{tpu_custom_call.1} parent=1 // pred_check
      _
    $region7: #{tpu_custom_call.1} parent=1 // pred_check_branch
      %21 = sbr.rel (0) target = $region9
    $region8: #{tpu_custom_call.1} parent=1 // pred_region
      _
    $region9: #{tpu_custom_call.1} parent=1 // pred_fallthru
      _
    // Predicated region
    $region10: #{tpu_custom_call.1} parent=1 // pred_check
      _
    $region11: #{tpu_custom_call.1} parent=1 // pred_check_branch
      %23 = sbr.rel (0) target = $region13
    $region12: #{tpu_custom_call.1} parent=1 // pred_region
      _
    $region13: #{tpu_custom_call.1} parent=1 // pred_fallthru
      _
    // Predicated region
    $region14: #{tpu_custom_call.1} parent=1 // pred_check
      _
    $region15: #{tpu_custom_call.1} parent=1 // pred_check_branch
      %25 = sbr.rel (0) target = $region17
    $region16: #{tpu_custom_call.1} parent=1 // pred_region
      _
    $region17: #{tpu_custom_call.1} parent=1 // pred_fallthru
      _
    // Predicated region
    $region18: #{tpu_custom_call.1} parent=1 // pred_check
      _
    $region19: #{tpu_custom_call.1} parent=1 // pred_check_branch
      %27 = sbr.rel (0) target = $region21
    $region20: #{tpu_custom_call.1} parent=1 // pred_region
      _
    $region21: #{tpu_custom_call.1} parent=1 // pred_fallthru
      _
    // Predicated region
    $region22: #{tpu_custom_call.1} parent=1 // pred_check
      _
    $region23: #{tpu_custom_call.1} parent=1 // pred_check_branch
      %29 = sbr.rel (0) target = $region25
    $region24: #{tpu_custom_call.1} parent=1 // pred_region
      %s31 = ssub.s32 1024, 1024
      %32 = vsyncadd [#allocation3], %s31
      %s33 = sshll.u32 [#allocation2], 4
      %s34 = int_to_ptr.vmem [resolvable:$true] %s33
      %39 = dma.hbm_to_vmem [thread:$0]  %s5, 1024, %s34, [#allocation3], 64, 64, 4
    $region25: #{tpu_custom_call.1} parent=1 // pred_fallthru
      _
    // Predicated region
    $region26: #{tpu_custom_call.1} parent=1 // pred_check
      _
    $region27: #{tpu_custom_call.1} parent=1 // pred_check_branch
      %41 = sbr.rel (0) target = $region29
    $region28: #{tpu_custom_call.1} parent=1 // pred_region
      _
    $region29: #{tpu_custom_call.1} parent=1 // pred_fallthru
      _
    // Predicated region
    $region30: #{tpu_custom_call.1} parent=1 // pred_check
      _
    $region31: #{tpu_custom_call.1} parent=1 // pred_check_branch
      %43 = sbr.rel (0) target = $region33
    $region32: #{tpu_custom_call.1} parent=1 // pred_region
      %s45 = ssub.s32 1024, 1024
      %46 = vsyncadd [#allocation5], %s45
      %s47 = sshll.u32 [#allocation4], 4
      %s48 = int_to_ptr.vmem [resolvable:$true] %s47
      %53 = dma.hbm_to_vmem [thread:$0]  %s7, 1024, %s48, [#allocation5], 64, 64, 4
    $region33: #{tpu_custom_call.1} parent=1 // pred_fallthru
      _
    // Predicated region
    $region34: #{tpu_custom_call.1} parent=1 // pred_check
      _
    $region35: #{tpu_custom_call.1} parent=1 // pred_check_branch
      %55 = sbr.rel (0) target = $region37
    $region36: #{tpu_custom_call.1} parent=1 // pred_region
      _
    $region37: #{tpu_custom_call.1} parent=1 // pred_fallthru
      _
    // Predicated region
    $region38: #{tpu_custom_call.1} parent=1 // pred_check
      _
    $region39: #{tpu_custom_call.1} parent=1 // pred_check_branch
      %57 = sbr.rel (0) target = $region41
    $region40: #{tpu_custom_call.1} parent=1 // pred_region
      %s59 = ssub.s32 1024, 1024
      %60 = vsyncadd [#allocation5], %s59
      %s61 = sshll.u32 [#allocation6], 4
      %s62 = int_to_ptr.vmem [resolvable:$true] %s61
      %67 = dma.hbm_to_vmem [thread:$0]  %s9, 1024, %s62, [#allocation5], 64, 64, 4
    $region41: #{tpu_custom_call.1} parent=1 // pred_fallthru
      _
    // Predicated region
    $region42: #{tpu_custom_call.1} parent=1 // pred_check
      _
    $region43: #{tpu_custom_call.1} parent=1 // pred_check_branch
      %69 = sbr.rel (0) target = $region45
    $region44: #{tpu_custom_call.1} parent=1 // pred_region
      _
    $region45: #{tpu_custom_call.1} parent=1 // pred_fallthru
      _
    // Predicated region
    $region46: #{tpu_custom_call.1} parent=1 // pred_check
      _
    $region47: #{tpu_custom_call.1} parent=1 // pred_check_branch
      %71 = sbr.rel (0) target = $region49
    $region48: #{tpu_custom_call.1} parent=1 // pred_region
      %72 = dma.done [#allocation3], 1024
    $region49: #{tpu_custom_call.1} parent=1 // pred_fallthru
      _
    // Predicated region
    $region50: #{tpu_custom_call.1} parent=1 // pred_check
      _
    $region51: #{tpu_custom_call.1} parent=1 // pred_check_branch
      %74 = sbr.rel (0) target = $region53
    $region52: #{tpu_custom_call.1} parent=1 // pred_region
      %75 = dma.done [#allocation5], 1024
    $region53: #{tpu_custom_call.1} parent=1 // pred_fallthru
      _
    // Predicated region
    $region54: #{tpu_custom_call.1} parent=1 // pred_check
      _
    $region55: #{tpu_custom_call.1} parent=1 // pred_check_branch
      %77 = sbr.rel (0) target = $region57
    $region56: #{tpu_custom_call.1} parent=1 // pred_region
      %78 = dma.done [#allocation5], 1024
    $region57: #{tpu_custom_call.1} parent=1 // pred_fallthru
      _
    %v80 = vld [vmem:[%s0] sm:$0xf]
    %v81 = vld [vmem:[%s0 + $0x4] sm:$0xf]
    %v82 = vld [vmem:[%s0 + $0x8] sm:$0xf]
    %v83 = vld [vmem:[%s0 + $0xc] sm:$0xf]
    %v84 = vld [vmem:[%s0 + $0x10] sm:$0xf]
    %v85 = vld [vmem:[%s0 + $0x14] sm:$0xf]
    %v86 = vld [vmem:[%s0 + $0x18] sm:$0xf]
    %v87 = vld [vmem:[%s0 + $0x1c] sm:$0xf]
    %v88 = vld [vmem:[%s0 + $0x20] sm:$0xf]
    %v89 = vld [vmem:[%s0 + $0x24] sm:$0xf]
    %v90 = vld [vmem:[%s0 + $0x28] sm:$0xf]
    %v91 = vld [vmem:[%s0 + $0x2c] sm:$0xf]
    %v92 = vld [vmem:[%s0 + $0x30] sm:$0xf]
    %v93 = vld [vmem:[%s0 + $0x34] sm:$0xf]
    %v94 = vld [vmem:[%s0 + $0x38] sm:$0xf]
    %v95 = vld [vmem:[%s0 + $0x3c] sm:$0xf]
    %v96 = vld [vmem:[%s1] sm:$0xf]
    %v97 = vld [vmem:[%s1 + $0x4] sm:$0xf]
    %v98 = vld [vmem:[%s2] sm:$0x1]
    %v100 = vlaneseq
    %v101 = vshrl.u32 %v100, 7
    %v102 = vsub.s32 0, %v101
    %v103 = vrot.slane %v98, %v102
    %v121 = vunpack.c.l.b16 %v80
    %v122 = vunpack.c.l.b16 %v81
    %v123 = vunpack.c.l.b16 %v82
    %v124 = vunpack.c.l.b16 %v83
    %v125 = vunpack.c.l.b16 %v84
    %v126 = vunpack.c.l.b16 %v85
    %v127 = vunpack.c.l.b16 %v86
    %v128 = vunpack.c.l.b16 %v87
    %v129 = vunpack.c.l.b16 %v88
    %v130 = vunpack.c.l.b16 %v89
    %v131 = vunpack.c.l.b16 %v90
    %v132 = vunpack.c.l.b16 %v91
    %v133 = vunpack.c.l.b16 %v92
    %v134 = vunpack.c.l.b16 %v93
    %v135 = vunpack.c.l.b16 %v94
    %v136 = vunpack.c.l.b16 %v95
    %v137 = vpack.c.b16 %v122, %v121
    %v138 = vpack.c.b16 %v124, %v123
    %v139 = vpack.c.b16 %v126, %v125
    %v140 = vpack.c.b16 %v128, %v127
    %v141 = vpack.c.b16 %v130, %v129
    %v142 = vpack.c.b16 %v132, %v131
    %v143 = vpack.c.b16 %v134, %v133
    %v144 = vpack.c.b16 %v136, %v135
    %v147 = vunpack.c.l.b16 %v96
    %v148 = vunpack.c.l.b16 %v97
    %v149 = vpack.c.b16 %v148, %v147
    %vm151 = vcmask 130048
    %v153 = vsel %vm151, %v137, 0
    %v156 = vsel %vm151, %v138, 0
    %v159 = vsel %vm151, %v139, 0
    %v162 = vsel %vm151, %v140, 0
    %v165 = vsel %vm151, %v141, 0
    %v168 = vsel %vm151, %v142, 0
    %v171 = vsel %vm151, %v143, 0
    %v174 = vsel %vm151, %v144, 0
    %176 = vmatprep.subr.bf16.mxu0 0
    %177 = vmatpush1.bf16.msra.mxu0 %v149
    %178 = vmatprep.subr.bf16.mxu0 0
    %179 = vmatpush1.bf16.msra.mxu0 0
    %180 = vmatprep.subr.bf16.mxu0 0
    %181 = vmatpush1.bf16.msra.mxu0 0
    %182 = vmatprep.subr.bf16.mxu0 0
    %183 = vmatpush1.bf16.msra.mxu0 0
    %184 = vmatprep.subr.bf16.mxu0 0
    %185 = vmatpush1.bf16.msra.mxu0 0
    %186 = vmatprep.subr.bf16.mxu0 0
    %187 = vmatpush1.bf16.msra.mxu0 0
    %188 = vmatprep.subr.bf16.mxu0 0
    %189 = vmatpush1.bf16.msra.mxu0 0
    %190 = vmatprep.subr.bf16.mxu0 0
    %191 = vmatpush1.bf16.msra.mxu0 0
    %192 = vmatprep.subr.bf16.mxu0 0
    %193 = vmatpush1.bf16.msra.mxu0 0
    %194 = vmatprep.subr.bf16.mxu0 0
    %195 = vmatpush1.bf16.msra.mxu0 0
    %196 = vmatprep.subr.bf16.mxu0 0
    %197 = vmatpush1.bf16.msra.mxu0 0
    %198 = vmatprep.subr.bf16.mxu0 0
    %199 = vmatpush1.bf16.msra.mxu0 0
    %200 = vmatprep.subr.bf16.mxu0 0
    %201 = vmatpush1.bf16.msra.mxu0 0
    %202 = vmatprep.subr.bf16.mxu0 0
    %203 = vmatpush1.bf16.msra.mxu0 0
    %204 = vmatprep.subr.bf16.mxu0 0
    %205 = vmatpush1.bf16.msra.mxu0 0
    %206 = vmatprep.subr.bf16.mxu0 0
    %207 = vmatpush1.bf16.msra.mxu0 0
    %208 = vmatprep.mubr.bf16.mxu0 0
    %209 = vmatmul.mubr.bf16.gmra.mrb[0].mxu0 %v153
    %v210 = vpop.f32.mrb[0].mxu0
    %v211 = vadd.f32 %v103, %v210
    %v212 = vpop.f32.mrb[0].mxu0
    %v213 = vpop.f32.mrb[0].mxu0
    %v214 = vadd.f32 %v103, %v213
    %v215 = vpop.f32.mrb[0].mxu0
    %216 = vmatprep.mubr.bf16.mxu0 0
    %217 = vmatmul.mubr.bf16.gmra.mrb[0].mxu0 %v156
    %v218 = vpop.f32.mrb[0].mxu0
    %v219 = vadd.f32 %v103, %v218
    %v220 = vpop.f32.mrb[0].mxu0
    %v221 = vpop.f32.mrb[0].mxu0
    %v222 = vadd.f32 %v103, %v221
    %v223 = vpop.f32.mrb[0].mxu0
    %224 = vmatprep.mubr.bf16.mxu0 0
    %225 = vmatmul.mubr.bf16.gmra.mrb[0].mxu0 %v159
    %v226 = vpop.f32.mrb[0].mxu0
    %v227 = vadd.f32 %v103, %v226
    %v228 = vpop.f32.mrb[0].mxu0
    %v229 = vpop.f32.mrb[0].mxu0
    %v230 = vadd.f32 %v103, %v229
    %v231 = vpop.f32.mrb[0].mxu0
    %232 = vmatprep.mubr.bf16.mxu0 0
    %233 = vmatmul.mubr.bf16.gmra.mrb[0].mxu0 %v162
    %v234 = vpop.f32.mrb[0].mxu0
    %v235 = vadd.f32 %v103, %v234
    %v236 = vpop.f32.mrb[0].mxu0
    %v237 = vpop.f32.mrb[0].mxu0
    %v238 = vadd.f32 %v103, %v237
    %v239 = vpop.f32.mrb[0].mxu0
    %240 = vmatprep.mubr.bf16.mxu0 0
    %241 = vmatmul.mubr.bf16.gmra.mrb[0].mxu0 %v165
    %v242 = vpop.f32.mrb[0].mxu0
    %v243 = vadd.f32 %v103, %v242
    %v244 = vpop.f32.mrb[0].mxu0
    %v245 = vpop.f32.mrb[0].mxu0
    %v246 = vadd.f32 %v103, %v245
    %v247 = vpop.f32.mrb[0].mxu0
    %248 = vmatprep.mubr.bf16.mxu0 0
    %249 = vmatmul.mubr.bf16.gmra.mrb[0].mxu0 %v168
    %v250 = vpop.f32.mrb[0].mxu0
    %v251 = vadd.f32 %v103, %v250
    %v252 = vpop.f32.mrb[0].mxu0
    %v253 = vpop.f32.mrb[0].mxu0
    %v254 = vadd.f32 %v103, %v253
    %v255 = vpop.f32.mrb[0].mxu0
    %256 = vmatprep.mubr.bf16.mxu0 0
    %257 = vmatmul.mubr.bf16.gmra.mrb[0].mxu0 %v171
    %v258 = vpop.f32.mrb[0].mxu0
    %v259 = vadd.f32 %v103, %v258
    %v260 = vpop.f32.mrb[0].mxu0
    %v261 = vpop.f32.mrb[0].mxu0
    %v262 = vadd.f32 %v103, %v261
    %v263 = vpop.f32.mrb[0].mxu0
    %264 = vmatprep.mubr.bf16.mxu0 0
    %265 = vmatmul.mubr.bf16.gmra.mrb[0].mxu0 %v174
    %v266 = vpop.f32.mrb[0].mxu0
    %v267 = vadd.f32 %v103, %v266
    %v268 = vpop.f32.mrb[0].mxu0
    %v269 = vpop.f32.mrb[0].mxu0
    %v270 = vadd.f32 %v103, %v269
    %v271 = vpop.f32.mrb[0].mxu0
    %272 = vdwg.mxu0
    %v273 = vmax.f32 %v211, 0.0
    %v274 = vmax.f32 %v214, 0.0
    %v275 = vmax.f32 %v219, 0.0
    %v276 = vmax.f32 %v222, 0.0
    %v277 = vmax.f32 %v227, 0.0
    %v278 = vmax.f32 %v230, 0.0
    %v279 = vmax.f32 %v235, 0.0
    %v280 = vmax.f32 %v238, 0.0
    %v281 = vmax.f32 %v243, 0.0
    %v282 = vmax.f32 %v246, 0.0
    %v283 = vmax.f32 %v251, 0.0
    %v284 = vmax.f32 %v254, 0.0
    %v285 = vmax.f32 %v259, 0.0
    %v286 = vmax.f32 %v262, 0.0
    %v287 = vmax.f32 %v267, 0.0
    %v288 = vmax.f32 %v270, 0.0
    %v289 = vpack.c.bf16 %v274, %v273
    %v290 = vpack.c.bf16 %v276, %v275
    %v291 = vpack.c.bf16 %v278, %v277
    %v292 = vpack.c.bf16 %v280, %v279
    %v293 = vpack.c.bf16 %v282, %v281
    %v294 = vpack.c.bf16 %v284, %v283
    %v295 = vpack.c.bf16 %v286, %v285
    %v296 = vpack.c.bf16 %v288, %v287
    %v297 = vld [vmem:[%s3] sm:$0xf]
    %v298 = vld [vmem:[%s3 + $0x4] sm:$0xf]
    %v299 = vld [vmem:[%s3 + $0x8] sm:$0xf]
    %v300 = vld [vmem:[%s3 + $0xc] sm:$0xf]
    %v301 = vld [vmem:[%s3 + $0x10] sm:$0xf]
    %v302 = vld [vmem:[%s3 + $0x14] sm:$0xf]
    %v303 = vld [vmem:[%s3 + $0x18] sm:$0xf]
    %v304 = vld [vmem:[%s3 + $0x1c] sm:$0xf]
    %v305 = vld [vmem:[%s3 + $0x20] sm:$0xf]
    %v306 = vld [vmem:[%s3 + $0x24] sm:$0xf]
    %v307 = vld [vmem:[%s3 + $0x28] sm:$0xf]
    %v308 = vld [vmem:[%s3 + $0x2c] sm:$0xf]
    %v309 = vld [vmem:[%s3 + $0x30] sm:$0xf]
    %v310 = vld [vmem:[%s3 + $0x34] sm:$0xf]
    %v311 = vld [vmem:[%s3 + $0x38] sm:$0xf]
    %v312 = vld [vmem:[%s3 + $0x3c] sm:$0xf]
    %v313 = vld [vmem:[%s4] sm:$0x1]
    %v315 = vlaneseq
    %v316 = vshrl.u32 %v315, 7
    %v317 = vsub.s32 0, %v316
    %v318 = vrot.slane %v313, %v317
    %v336 = vunpack.c.l.b16 %v297
    %v337 = vunpack.c.l.b16 %v298
    %v338 = vunpack.c.l.b16 %v299
    %v339 = vunpack.c.l.b16 %v300
    %v340 = vunpack.c.l.b16 %v301
    %v341 = vunpack.c.l.b16 %v302
    %v342 = vunpack.c.l.b16 %v303
    %v343 = vunpack.c.l.b16 %v304
    %v344 = vunpack.c.l.b16 %v305
    %v345 = vunpack.c.l.b16 %v306
    %v346 = vunpack.c.l.b16 %v307
    %v347 = vunpack.c.l.b16 %v308
    %v348 = vunpack.c.l.b16 %v309
    %v349 = vunpack.c.l.b16 %v310
    %v350 = vunpack.c.l.b16 %v311
    %v351 = vunpack.c.l.b16 %v312
    %v352 = vpack.c.b16 %v337, %v336
    %v353 = vpack.c.b16 %v339, %v338
    %v354 = vpack.c.b16 %v341, %v340
    %v355 = vpack.c.b16 %v343, %v342
    %v356 = vpack.c.b16 %v345, %v344
    %v357 = vpack.c.b16 %v347, %v346
    %v358 = vpack.c.b16 %v349, %v348
    %v359 = vpack.c.b16 %v351, %v350
    %368 = vmatprep.subr.bf16.mxu0 0
    %369 = vmatpush1.bf16.msra.mxu0 %v352
    %370 = vmatprep.subr.bf16.mxu0 0
    %371 = vmatpush1.bf16.msra.mxu0 %v353
    %372 = vmatprep.subr.bf16.mxu0 0
    %373 = vmatpush1.bf16.msra.mxu0 %v354
    %374 = vmatprep.subr.bf16.mxu0 0
    %375 = vmatpush1.bf16.msra.mxu0 %v355
    %376 = vmatprep.subr.bf16.mxu0 0
    %377 = vmatpush1.bf16.msra.mxu0 %v356
    %378 = vmatprep.subr.bf16.mxu0 0
    %379 = vmatpush1.bf16.msra.mxu0 %v357
    %380 = vmatprep.subr.bf16.mxu0 0
    %381 = vmatpush1.bf16.msra.mxu0 %v358
    %382 = vmatprep.subr.bf16.mxu0 0
    %383 = vmatpush1.bf16.msra.mxu0 %v359
    %384 = vmatprep.subr.bf16.mxu0 0
    %385 = vmatpush1.bf16.msra.mxu0 0
    %386 = vmatprep.subr.bf16.mxu0 0
    %387 = vmatpush1.bf16.msra.mxu0 0
    %388 = vmatprep.subr.bf16.mxu0 0
    %389 = vmatpush1.bf16.msra.mxu0 0
    %390 = vmatprep.subr.bf16.mxu0 0
    %391 = vmatpush1.bf16.msra.mxu0 0
    %392 = vmatprep.subr.bf16.mxu0 0
    %393 = vmatpush1.bf16.msra.mxu0 0
    %394 = vmatprep.subr.bf16.mxu0 0
    %395 = vmatpush1.bf16.msra.mxu0 0
    %396 = vmatprep.subr.bf16.mxu0 0
    %397 = vmatpush1.bf16.msra.mxu0 0
    %398 = vmatprep.subr.bf16.mxu0 0
    %399 = vmatpush1.bf16.msra.mxu0 0
    %400 = vmatprep.mubr.bf16.mxu0 0
    %401 = vmatmul.mubr.bf16.gmra.mrb[0].mxu0 %v289
    %v402 = vpop.f32.mrb[0].mxu0
    %v403 = vadd.f32 %v318, %v402
    %v404 = vpop.f32.mrb[0].mxu0
    %v405 = vpop.f32.mrb[0].mxu0
    %v406 = vadd.f32 %v318, %v405
    %v407 = vpop.f32.mrb[0].mxu0
    %408 = vmatprep.mubr.bf16.mxu0 0
    %409 = vmatmul.mubr.bf16.gmra.mrb[0].mxu0 %v290
    %v410 = vpop.f32.mrb[0].mxu0
    %v411 = vadd.f32 %v318, %v410
    %v412 = vpop.f32.mrb[0].mxu0
    %v413 = vpop.f32.mrb[0].mxu0
    %v414 = vadd.f32 %v318, %v413
    %v415 = vpop.f32.mrb[0].mxu0
    %416 = vmatprep.mubr.bf16.mxu0 0
    %417 = vmatmul.mubr.bf16.gmra.mrb[0].mxu0 %v291
    %v418 = vpop.f32.mrb[0].mxu0
    %v419 = vadd.f32 %v318, %v418
    %v420 = vpop.f32.mrb[0].mxu0
    %v421 = vpop.f32.mrb[0].mxu0
    %v422 = vadd.f32 %v318, %v421
    %v423 = vpop.f32.mrb[0].mxu0
    %424 = vmatprep.mubr.bf16.mxu0 0
    %425 = vmatmul.mubr.bf16.gmra.mrb[0].mxu0 %v292
    %v426 = vpop.f32.mrb[0].mxu0
    %v427 = vadd.f32 %v318, %v426
    %v428 = vpop.f32.mrb[0].mxu0
    %v429 = vpop.f32.mrb[0].mxu0
    %v430 = vadd.f32 %v318, %v429
    %v431 = vpop.f32.mrb[0].mxu0
    %432 = vmatprep.mubr.bf16.mxu0 0
    %433 = vmatmul.mubr.bf16.gmra.mrb[0].mxu0 %v293
    %v434 = vpop.f32.mrb[0].mxu0
    %v435 = vadd.f32 %v318, %v434
    %v436 = vpop.f32.mrb[0].mxu0
    %v437 = vpop.f32.mrb[0].mxu0
    %v438 = vadd.f32 %v318, %v437
    %v439 = vpop.f32.mrb[0].mxu0
    %440 = vmatprep.mubr.bf16.mxu0 0
    %441 = vmatmul.mubr.bf16.gmra.mrb[0].mxu0 %v294
    %v442 = vpop.f32.mrb[0].mxu0
    %v443 = vadd.f32 %v318, %v442
    %v444 = vpop.f32.mrb[0].mxu0
    %v445 = vpop.f32.mrb[0].mxu0
    %v446 = vadd.f32 %v318, %v445
    %v447 = vpop.f32.mrb[0].mxu0
    %448 = vmatprep.mubr.bf16.mxu0 0
    %449 = vmatmul.mubr.bf16.gmra.mrb[0].mxu0 %v295
    %v450 = vpop.f32.mrb[0].mxu0
    %v451 = vadd.f32 %v318, %v450
    %v452 = vpop.f32.mrb[0].mxu0
    %v453 = vpop.f32.mrb[0].mxu0
    %v454 = vadd.f32 %v318, %v453
    %v455 = vpop.f32.mrb[0].mxu0
    %456 = vmatprep.mubr.bf16.mxu0 0
    %457 = vmatmul.mubr.bf16.gmra.mrb[0].mxu0 %v296
    %v458 = vpop.f32.mrb[0].mxu0
    %v459 = vadd.f32 %v318, %v458
    %v460 = vpop.f32.mrb[0].mxu0
    %v461 = vpop.f32.mrb[0].mxu0
    %v462 = vadd.f32 %v318, %v461
    %v463 = vpop.f32.mrb[0].mxu0
    %464 = vdwg.mxu0
    %v465 = vmax.f32 %v403, 0.0
    %v466 = vmax.f32 %v406, 0.0
    %v467 = vmax.f32 %v411, 0.0
    %v468 = vmax.f32 %v414, 0.0
    %v469 = vmax.f32 %v419, 0.0
    %v470 = vmax.f32 %v422, 0.0
    %v471 = vmax.f32 %v427, 0.0
    %v472 = vmax.f32 %v430, 0.0
    %v473 = vmax.f32 %v435, 0.0
    %v474 = vmax.f32 %v438, 0.0
    %v475 = vmax.f32 %v443, 0.0
    %v476 = vmax.f32 %v446, 0.0
    %v477 = vmax.f32 %v451, 0.0
    %v478 = vmax.f32 %v454, 0.0
    %v479 = vmax.f32 %v459, 0.0
    %v480 = vmax.f32 %v462, 0.0
    %v481 = vpack.c.bf16 %v466, %v465
    %v482 = vpack.c.bf16 %v468, %v467
    %v483 = vpack.c.bf16 %v470, %v469
    %v484 = vpack.c.bf16 %v472, %v471
    %v485 = vpack.c.bf16 %v474, %v473
    %v486 = vpack.c.bf16 %v476, %v475
    %v487 = vpack.c.bf16 %v478, %v477
    %v488 = vpack.c.bf16 %v480, %v479
    %v489 = vld [vmem:[#allocation2] sm:$0xf]
    %v490 = vld [vmem:[#allocation2 + $0x4] sm:$0xf]
    %v491 = vld [vmem:[#allocation2 + $0x8] sm:$0xf]
    %v492 = vld [vmem:[#allocation2 + $0xc] sm:$0xf]
    %v493 = vld [vmem:[#allocation2 + $0x10] sm:$0xf]
    %v494 = vld [vmem:[#allocation2 + $0x14] sm:$0xf]
    %v495 = vld [vmem:[#allocation2 + $0x18] sm:$0xf]
    %v496 = vld [vmem:[#allocation2 + $0x1c] sm:$0xf]
    %v497 = vld [vmem:[#allocation2 + $0x20] sm:$0xf]
    %v498 = vld [vmem:[#allocation2 + $0x24] sm:$0xf]
    %v499 = vld [vmem:[#allocation2 + $0x28] sm:$0xf]
    %v500 = vld [vmem:[#allocation2 + $0x2c] sm:$0xf]
    %v501 = vld [vmem:[#allocation2 + $0x30] sm:$0xf]
    %v502 = vld [vmem:[#allocation2 + $0x34] sm:$0xf]
    %v503 = vld [vmem:[#allocation2 + $0x38] sm:$0xf]
    %v504 = vld [vmem:[#allocation2 + $0x3c] sm:$0xf]
    %v505 = vld [vmem:[%s6] sm:$0x1]
    %v507 = vlaneseq
    %v508 = vshrl.u32 %v507, 7
    %v509 = vsub.s32 0, %v508
    %v510 = vrot.slane %v505, %v509
    %v528 = vunpack.c.l.b16 %v489
    %v529 = vunpack.c.l.b16 %v490
    %v530 = vunpack.c.l.b16 %v491
    %v531 = vunpack.c.l.b16 %v492
    %v532 = vunpack.c.l.b16 %v493
    %v533 = vunpack.c.l.b16 %v494
    %v534 = vunpack.c.l.b16 %v495
    %v535 = vunpack.c.l.b16 %v496
    %v536 = vunpack.c.l.b16 %v497
    %v537 = vunpack.c.l.b16 %v498
    %v538 = vunpack.c.l.b16 %v499
    %v539 = vunpack.c.l.b16 %v500
    %v540 = vunpack.c.l.b16 %v501
    %v541 = vunpack.c.l.b16 %v502
    %v542 = vunpack.c.l.b16 %v503
    %v543 = vunpack.c.l.b16 %v504
    %v544 = vpack.c.b16 %v529, %v528
    %v545 = vpack.c.b16 %v531, %v530
    %v546 = vpack.c.b16 %v533, %v532
    %v547 = vpack.c.b16 %v535, %v534
    %v548 = vpack.c.b16 %v537, %v536
    %v549 = vpack.c.b16 %v539, %v538
    %v550 = vpack.c.b16 %v541, %v540
    %v551 = vpack.c.b16 %v543, %v542
    %560 = vmatprep.subr.bf16.mxu0 0
    %561 = vmatpush1.bf16.msra.mxu0 %v544
    %562 = vmatprep.subr.bf16.mxu0 0
    %563 = vmatpush1.bf16.msra.mxu0 %v545
    %564 = vmatprep.subr.bf16.mxu0 0
    %565 = vmatpush1.bf16.msra.mxu0 %v546
    %566 = vmatprep.subr.bf16.mxu0 0
    %567 = vmatpush1.bf16.msra.mxu0 %v547
    %568 = vmatprep.subr.bf16.mxu0 0
    %569 = vmatpush1.bf16.msra.mxu0 %v548
    %570 = vmatprep.subr.bf16.mxu0 0
    %571 = vmatpush1.bf16.msra.mxu0 %v549
    %572 = vmatprep.subr.bf16.mxu0 0
    %573 = vmatpush1.bf16.msra.mxu0 %v550
    %574 = vmatprep.subr.bf16.mxu0 0
    %575 = vmatpush1.bf16.msra.mxu0 %v551
    %576 = vmatprep.subr.bf16.mxu0 0
    %577 = vmatpush1.bf16.msra.mxu0 0
    %578 = vmatprep.subr.bf16.mxu0 0
    %579 = vmatpush1.bf16.msra.mxu0 0
    %580 = vmatprep.subr.bf16.mxu0 0
    %581 = vmatpush1.bf16.msra.mxu0 0
    %582 = vmatprep.subr.bf16.mxu0 0
    %583 = vmatpush1.bf16.msra.mxu0 0
    %584 = vmatprep.subr.bf16.mxu0 0
    %585 = vmatpush1.bf16.msra.mxu0 0
    %586 = vmatprep.subr.bf16.mxu0 0
    %587 = vmatpush1.bf16.msra.mxu0 0
    %588 = vmatprep.subr.bf16.mxu0 0
    %589 = vmatpush1.bf16.msra.mxu0 0
    %590 = vmatprep.subr.bf16.mxu0 0
    %591 = vmatpush1.bf16.msra.mxu0 0
    %592 = vmatprep.mubr.bf16.mxu0 0
    %593 = vmatmul.mubr.bf16.gmra.mrb[0].mxu0 %v481
    %v594 = vpop.f32.mrb[0].mxu0
    %v595 = vadd.f32 %v510, %v594
    %v596 = vpop.f32.mrb[0].mxu0
    %v597 = vpop.f32.mrb[0].mxu0
    %v598 = vadd.f32 %v510, %v597
    %v599 = vpop.f32.mrb[0].mxu0
    %600 = vmatprep.mubr.bf16.mxu0 0
    %601 = vmatmul.mubr.bf16.gmra.mrb[0].mxu0 %v482
    %v602 = vpop.f32.mrb[0].mxu0
    %v603 = vadd.f32 %v510, %v602
    %v604 = vpop.f32.mrb[0].mxu0
    %v605 = vpop.f32.mrb[0].mxu0
    %v606 = vadd.f32 %v510, %v605
    %v607 = vpop.f32.mrb[0].mxu0
    %608 = vmatprep.mubr.bf16.mxu0 0
    %609 = vmatmul.mubr.bf16.gmra.mrb[0].mxu0 %v483
    %v610 = vpop.f32.mrb[0].mxu0
    %v611 = vadd.f32 %v510, %v610
    %v612 = vpop.f32.mrb[0].mxu0
    %v613 = vpop.f32.mrb[0].mxu0
    %v614 = vadd.f32 %v510, %v613
    %v615 = vpop.f32.mrb[0].mxu0
    %616 = vmatprep.mubr.bf16.mxu0 0
    %617 = vmatmul.mubr.bf16.gmra.mrb[0].mxu0 %v484
    %v618 = vpop.f32.mrb[0].mxu0
    %v619 = vadd.f32 %v510, %v618
    %v620 = vpop.f32.mrb[0].mxu0
    %v621 = vpop.f32.mrb[0].mxu0
    %v622 = vadd.f32 %v510, %v621
    %v623 = vpop.f32.mrb[0].mxu0
    %624 = vmatprep.mubr.bf16.mxu0 0
    %625 = vmatmul.mubr.bf16.gmra.mrb[0].mxu0 %v485
    %v626 = vpop.f32.mrb[0].mxu0
    %v627 = vadd.f32 %v510, %v626
    %v628 = vpop.f32.mrb[0].mxu0
    %v629 = vpop.f32.mrb[0].mxu0
    %v630 = vadd.f32 %v510, %v629
    %v631 = vpop.f32.mrb[0].mxu0
    %632 = vmatprep.mubr.bf16.mxu0 0
    %633 = vmatmul.mubr.bf16.gmra.mrb[0].mxu0 %v486
    %v634 = vpop.f32.mrb[0].mxu0
    %v635 = vadd.f32 %v510, %v634
    %v636 = vpop.f32.mrb[0].mxu0
    %v637 = vpop.f32.mrb[0].mxu0
    %v638 = vadd.f32 %v510, %v637
    %v639 = vpop.f32.mrb[0].mxu0
    %640 = vmatprep.mubr.bf16.mxu0 0
    %641 = vmatmul.mubr.bf16.gmra.mrb[0].mxu0 %v487
    %v642 = vpop.f32.mrb[0].mxu0
    %v643 = vadd.f32 %v510, %v642
    %v644 = vpop.f32.mrb[0].mxu0
    %v645 = vpop.f32.mrb[0].mxu0
    %v646 = vadd.f32 %v510, %v645
    %v647 = vpop.f32.mrb[0].mxu0
    %648 = vmatprep.mubr.bf16.mxu0 0
    %649 = vmatmul.mubr.bf16.gmra.mrb[0].mxu0 %v488
    %v650 = vpop.f32.mrb[0].mxu0
    %v651 = vadd.f32 %v510, %v650
    %v652 = vpop.f32.mrb[0].mxu0
    %v653 = vpop.f32.mrb[0].mxu0
    %v654 = vadd.f32 %v510, %v653
    %v655 = vpop.f32.mrb[0].mxu0
    %656 = vdwg.mxu0
    %v657 = vmax.f32 %v595, 0.0
    %v658 = vmax.f32 %v598, 0.0
    %v659 = vmax.f32 %v603, 0.0
    %v660 = vmax.f32 %v606, 0.0
    %v661 = vmax.f32 %v611, 0.0
    %v662 = vmax.f32 %v614, 0.0
    %v663 = vmax.f32 %v619, 0.0
    %v664 = vmax.f32 %v622, 0.0
    %v665 = vmax.f32 %v627, 0.0
    %v666 = vmax.f32 %v630, 0.0
    %v667 = vmax.f32 %v635, 0.0
    %v668 = vmax.f32 %v638, 0.0
    %v669 = vmax.f32 %v643, 0.0
    %v670 = vmax.f32 %v646, 0.0
    %v671 = vmax.f32 %v651, 0.0
    %v672 = vmax.f32 %v654, 0.0
    %v673 = vpack.c.bf16 %v658, %v657
    %v674 = vpack.c.bf16 %v660, %v659
    %v675 = vpack.c.bf16 %v662, %v661
    %v676 = vpack.c.bf16 %v664, %v663
    %v677 = vpack.c.bf16 %v666, %v665
    %v678 = vpack.c.bf16 %v668, %v667
    %v679 = vpack.c.bf16 %v670, %v669
    %v680 = vpack.c.bf16 %v672, %v671
    %v681 = vld [vmem:[#allocation4] sm:$0xf]
    %v682 = vld [vmem:[#allocation4 + $0x4] sm:$0xf]
    %v683 = vld [vmem:[#allocation4 + $0x8] sm:$0xf]
    %v684 = vld [vmem:[#allocation4 + $0xc] sm:$0xf]
    %v685 = vld [vmem:[#allocation4 + $0x10] sm:$0xf]
    %v686 = vld [vmem:[#allocation4 + $0x14] sm:$0xf]
    %v687 = vld [vmem:[#allocation4 + $0x18] sm:$0xf]
    %v688 = vld [vmem:[#allocation4 + $0x1c] sm:$0xf]
    %v689 = vld [vmem:[#allocation4 + $0x20] sm:$0xf]
    %v690 = vld [vmem:[#allocation4 + $0x24] sm:$0xf]
    %v691 = vld [vmem:[#allocation4 + $0x28] sm:$0xf]
    %v692 = vld [vmem:[#allocation4 + $0x2c] sm:$0xf]
    %v693 = vld [vmem:[#allocation4 + $0x30] sm:$0xf]
    %v694 = vld [vmem:[#allocation4 + $0x34] sm:$0xf]
    %v695 = vld [vmem:[#allocation4 + $0x38] sm:$0xf]
    %v696 = vld [vmem:[#allocation4 + $0x3c] sm:$0xf]
    %v697 = vld [vmem:[%s8] sm:$0x1]
    %v699 = vlaneseq
    %v700 = vshrl.u32 %v699, 7
    %v701 = vsub.s32 0, %v700
    %v702 = vrot.slane %v697, %v701
    %v720 = vunpack.c.l.b16 %v681
    %v721 = vunpack.c.l.b16 %v682
    %v722 = vunpack.c.l.b16 %v683
    %v723 = vunpack.c.l.b16 %v684
    %v724 = vunpack.c.l.b16 %v685
    %v725 = vunpack.c.l.b16 %v686
    %v726 = vunpack.c.l.b16 %v687
    %v727 = vunpack.c.l.b16 %v688
    %v728 = vunpack.c.l.b16 %v689
    %v729 = vunpack.c.l.b16 %v690
    %v730 = vunpack.c.l.b16 %v691
    %v731 = vunpack.c.l.b16 %v692
    %v732 = vunpack.c.l.b16 %v693
    %v733 = vunpack.c.l.b16 %v694
    %v734 = vunpack.c.l.b16 %v695
    %v735 = vunpack.c.l.b16 %v696
    %v736 = vpack.c.b16 %v721, %v720
    %v737 = vpack.c.b16 %v723, %v722
    %v738 = vpack.c.b16 %v725, %v724
    %v739 = vpack.c.b16 %v727, %v726
    %v740 = vpack.c.b16 %v729, %v728
    %v741 = vpack.c.b16 %v731, %v730
    %v742 = vpack.c.b16 %v733, %v732
    %v743 = vpack.c.b16 %v735, %v734
    %752 = vmatprep.subr.bf16.mxu0 0
    %753 = vmatpush1.bf16.msra.mxu0 %v736
    %754 = vmatprep.subr.bf16.mxu0 0
    %755 = vmatpush1.bf16.msra.mxu0 %v737
    %756 = vmatprep.subr.bf16.mxu0 0
    %757 = vmatpush1.bf16.msra.mxu0 %v738
    %758 = vmatprep.subr.bf16.mxu0 0
    %759 = vmatpush1.bf16.msra.mxu0 %v739
    %760 = vmatprep.subr.bf16.mxu0 0
    %761 = vmatpush1.bf16.msra.mxu0 %v740
    %762 = vmatprep.subr.bf16.mxu0 0
    %763 = vmatpush1.bf16.msra.mxu0 %v741
    %764 = vmatprep.subr.bf16.mxu0 0
    %765 = vmatpush1.bf16.msra.mxu0 %v742
    %766 = vmatprep.subr.bf16.mxu0 0
    %767 = vmatpush1.bf16.msra.mxu0 %v743
    %768 = vmatprep.subr.bf16.mxu0 0
    %769 = vmatpush1.bf16.msra.mxu0 0
    %770 = vmatprep.subr.bf16.mxu0 0
    %771 = vmatpush1.bf16.msra.mxu0 0
    %772 = vmatprep.subr.bf16.mxu0 0
    %773 = vmatpush1.bf16.msra.mxu0 0
    %774 = vmatprep.subr.bf16.mxu0 0
    %775 = vmatpush1.bf16.msra.mxu0 0
    %776 = vmatprep.subr.bf16.mxu0 0
    %777 = vmatpush1.bf16.msra.mxu0 0
    %778 = vmatprep.subr.bf16.mxu0 0
    %779 = vmatpush1.bf16.msra.mxu0 0
    %780 = vmatprep.subr.bf16.mxu0 0
    %781 = vmatpush1.bf16.msra.mxu0 0
    %782 = vmatprep.subr.bf16.mxu0 0
    %783 = vmatpush1.bf16.msra.mxu0 0
    %784 = vmatprep.mubr.bf16.mxu0 0
    %785 = vmatmul.mubr.bf16.gmra.mrb[0].mxu0 %v673
    %v786 = vpop.f32.mrb[0].mxu0
    %v787 = vadd.f32 %v702, %v786
    %v788 = vpop.f32.mrb[0].mxu0
    %v789 = vpop.f32.mrb[0].mxu0
    %v790 = vadd.f32 %v702, %v789
    %v791 = vpop.f32.mrb[0].mxu0
    %792 = vmatprep.mubr.bf16.mxu0 0
    %793 = vmatmul.mubr.bf16.gmra.mrb[0].mxu0 %v674
    %v794 = vpop.f32.mrb[0].mxu0
    %v795 = vadd.f32 %v702, %v794
    %v796 = vpop.f32.mrb[0].mxu0
    %v797 = vpop.f32.mrb[0].mxu0
    %v798 = vadd.f32 %v702, %v797
    %v799 = vpop.f32.mrb[0].mxu0
    %800 = vmatprep.mubr.bf16.mxu0 0
    %801 = vmatmul.mubr.bf16.gmra.mrb[0].mxu0 %v675
    %v802 = vpop.f32.mrb[0].mxu0
    %v803 = vadd.f32 %v702, %v802
    %v804 = vpop.f32.mrb[0].mxu0
    %v805 = vpop.f32.mrb[0].mxu0
    %v806 = vadd.f32 %v702, %v805
    %v807 = vpop.f32.mrb[0].mxu0
    %808 = vmatprep.mubr.bf16.mxu0 0
    %809 = vmatmul.mubr.bf16.gmra.mrb[0].mxu0 %v676
    %v810 = vpop.f32.mrb[0].mxu0
    %v811 = vadd.f32 %v702, %v810
    %v812 = vpop.f32.mrb[0].mxu0
    %v813 = vpop.f32.mrb[0].mxu0
    %v814 = vadd.f32 %v702, %v813
    %v815 = vpop.f32.mrb[0].mxu0
    %816 = vmatprep.mubr.bf16.mxu0 0
    %817 = vmatmul.mubr.bf16.gmra.mrb[0].mxu0 %v677
    %v818 = vpop.f32.mrb[0].mxu0
    %v819 = vadd.f32 %v702, %v818
    %v820 = vpop.f32.mrb[0].mxu0
    %v821 = vpop.f32.mrb[0].mxu0
    %v822 = vadd.f32 %v702, %v821
    %v823 = vpop.f32.mrb[0].mxu0
    %824 = vmatprep.mubr.bf16.mxu0 0
    %825 = vmatmul.mubr.bf16.gmra.mrb[0].mxu0 %v678
    %v826 = vpop.f32.mrb[0].mxu0
    %v827 = vadd.f32 %v702, %v826
    %v828 = vpop.f32.mrb[0].mxu0
    %v829 = vpop.f32.mrb[0].mxu0
    %v830 = vadd.f32 %v702, %v829
    %v831 = vpop.f32.mrb[0].mxu0
    %832 = vmatprep.mubr.bf16.mxu0 0
    %833 = vmatmul.mubr.bf16.gmra.mrb[0].mxu0 %v679
    %v834 = vpop.f32.mrb[0].mxu0
    %v835 = vadd.f32 %v702, %v834
    %v836 = vpop.f32.mrb[0].mxu0
    %v837 = vpop.f32.mrb[0].mxu0
    %v838 = vadd.f32 %v702, %v837
    %v839 = vpop.f32.mrb[0].mxu0
    %840 = vmatprep.mubr.bf16.mxu0 0
    %841 = vmatmul.mubr.bf16.gmra.mrb[0].mxu0 %v680
    %v842 = vpop.f32.mrb[0].mxu0
    %v843 = vadd.f32 %v702, %v842
    %v844 = vpop.f32.mrb[0].mxu0
    %v845 = vpop.f32.mrb[0].mxu0
    %v846 = vadd.f32 %v702, %v845
    %v847 = vpop.f32.mrb[0].mxu0
    %848 = vdwg.mxu0
    %v849 = vmax.f32 %v787, 0.0
    %v850 = vmax.f32 %v790, 0.0
    %v851 = vmax.f32 %v795, 0.0
    %v852 = vmax.f32 %v798, 0.0
    %v853 = vmax.f32 %v803, 0.0
    %v854 = vmax.f32 %v806, 0.0
    %v855 = vmax.f32 %v811, 0.0
    %v856 = vmax.f32 %v814, 0.0
    %v857 = vmax.f32 %v819, 0.0
    %v858 = vmax.f32 %v822, 0.0
    %v859 = vmax.f32 %v827, 0.0
    %v860 = vmax.f32 %v830, 0.0
    %v861 = vmax.f32 %v835, 0.0
    %v862 = vmax.f32 %v838, 0.0
    %v863 = vmax.f32 %v843, 0.0
    %v864 = vmax.f32 %v846, 0.0
    %v865 = vpack.c.bf16 %v850, %v849
    %v866 = vpack.c.bf16 %v852, %v851
    %v867 = vpack.c.bf16 %v854, %v853
    %v868 = vpack.c.bf16 %v856, %v855
    %v869 = vpack.c.bf16 %v858, %v857
    %v870 = vpack.c.bf16 %v860, %v859
    %v871 = vpack.c.bf16 %v862, %v861
    %v872 = vpack.c.bf16 %v864, %v863
    %v873 = vld [vmem:[#allocation6] sm:$0xf]
    %v874 = vld [vmem:[#allocation6 + $0x4] sm:$0xf]
    %v875 = vld [vmem:[#allocation6 + $0x8] sm:$0xf]
    %v876 = vld [vmem:[#allocation6 + $0xc] sm:$0xf]
    %v877 = vld [vmem:[#allocation6 + $0x10] sm:$0xf]
    %v878 = vld [vmem:[#allocation6 + $0x14] sm:$0xf]
    %v879 = vld [vmem:[#allocation6 + $0x18] sm:$0xf]
    %v880 = vld [vmem:[#allocation6 + $0x1c] sm:$0xf]
    %v881 = vld [vmem:[#allocation6 + $0x20] sm:$0xf]
    %v882 = vld [vmem:[#allocation6 + $0x24] sm:$0xf]
    %v883 = vld [vmem:[#allocation6 + $0x28] sm:$0xf]
    %v884 = vld [vmem:[#allocation6 + $0x2c] sm:$0xf]
    %v885 = vld [vmem:[#allocation6 + $0x30] sm:$0xf]
    %v886 = vld [vmem:[#allocation6 + $0x34] sm:$0xf]
    %v887 = vld [vmem:[#allocation6 + $0x38] sm:$0xf]
    %v888 = vld [vmem:[#allocation6 + $0x3c] sm:$0xf]
    %v889 = vld [vmem:[%s10] sm:$0x1]
    %v891 = vlaneseq
    %v892 = vshrl.u32 %v891, 7
    %v893 = vsub.s32 0, %v892
    %v894 = vrot.slane %v889, %v893
    %v912 = vunpack.c.l.b16 %v873
    %v913 = vunpack.c.l.b16 %v874
    %v914 = vunpack.c.l.b16 %v875
    %v915 = vunpack.c.l.b16 %v876
    %v916 = vunpack.c.l.b16 %v877
    %v917 = vunpack.c.l.b16 %v878
    %v918 = vunpack.c.l.b16 %v879
    %v919 = vunpack.c.l.b16 %v880
    %v920 = vunpack.c.l.b16 %v881
    %v921 = vunpack.c.l.b16 %v882
    %v922 = vunpack.c.l.b16 %v883
    %v923 = vunpack.c.l.b16 %v884
    %v924 = vunpack.c.l.b16 %v885
    %v925 = vunpack.c.l.b16 %v886
    %v926 = vunpack.c.l.b16 %v887
    %v927 = vunpack.c.l.b16 %v888
    %v928 = vpack.c.b16 %v913, %v912
    %v929 = vpack.c.b16 %v915, %v914
    %v930 = vpack.c.b16 %v917, %v916
    %v931 = vpack.c.b16 %v919, %v918
    %v932 = vpack.c.b16 %v921, %v920
    %v933 = vpack.c.b16 %v923, %v922
    %v934 = vpack.c.b16 %v925, %v924
    %v935 = vpack.c.b16 %v927, %v926
    %944 = vmatprep.subr.bf16.mxu0 0
    %945 = vmatpush1.bf16.msra.mxu0 %v928
    %946 = vmatprep.subr.bf16.mxu0 0
    %947 = vmatpush1.bf16.msra.mxu0 %v929
    %948 = vmatprep.subr.bf16.mxu0 0
    %949 = vmatpush1.bf16.msra.mxu0 %v930
    %950 = vmatprep.subr.bf16.mxu0 0
    %951 = vmatpush1.bf16.msra.mxu0 %v931
    %952 = vmatprep.subr.bf16.mxu0 0
    %953 = vmatpush1.bf16.msra.mxu0 %v932
    %954 = vmatprep.subr.bf16.mxu0 0
    %955 = vmatpush1.bf16.msra.mxu0 %v933
    %956 = vmatprep.subr.bf16.mxu0 0
    %957 = vmatpush1.bf16.msra.mxu0 %v934
    %958 = vmatprep.subr.bf16.mxu0 0
    %959 = vmatpush1.bf16.msra.mxu0 %v935
    %960 = vmatprep.subr.bf16.mxu0 0
    %961 = vmatpush1.bf16.msra.mxu0 0
    %962 = vmatprep.subr.bf16.mxu0 0
    %963 = vmatpush1.bf16.msra.mxu0 0
    %964 = vmatprep.subr.bf16.mxu0 0
    %965 = vmatpush1.bf16.msra.mxu0 0
    %966 = vmatprep.subr.bf16.mxu0 0
    %967 = vmatpush1.bf16.msra.mxu0 0
    %968 = vmatprep.subr.bf16.mxu0 0
    %969 = vmatpush1.bf16.msra.mxu0 0
    %970 = vmatprep.subr.bf16.mxu0 0
    %971 = vmatpush1.bf16.msra.mxu0 0
    %972 = vmatprep.subr.bf16.mxu0 0
    %973 = vmatpush1.bf16.msra.mxu0 0
    %974 = vmatprep.subr.bf16.mxu0 0
    %975 = vmatpush1.bf16.msra.mxu0 0
    %976 = vmatprep.mubr.bf16.mxu0 0
    %977 = vmatmul.mubr.bf16.gmra.mrb[0].mxu0 %v865
    %v978 = vpop.f32.mrb[0].mxu0
    %v979 = vadd.f32 %v894, %v978
    %v980 = vpop.f32.mrb[0].mxu0
    %v981 = vpop.f32.mrb[0].mxu0
    %v982 = vadd.f32 %v894, %v981
    %v983 = vpop.f32.mrb[0].mxu0
    %984 = vmatprep.mubr.bf16.mxu0 0
    %985 = vmatmul.mubr.bf16.gmra.mrb[0].mxu0 %v866
    %v986 = vpop.f32.mrb[0].mxu0
    %v987 = vadd.f32 %v894, %v986
    %v988 = vpop.f32.mrb[0].mxu0
    %v989 = vpop.f32.mrb[0].mxu0
    %v990 = vadd.f32 %v894, %v989
    %v991 = vpop.f32.mrb[0].mxu0
    %992 = vmatprep.mubr.bf16.mxu0 0
    %993 = vmatmul.mubr.bf16.gmra.mrb[0].mxu0 %v867
    %v994 = vpop.f32.mrb[0].mxu0
    %v995 = vadd.f32 %v894, %v994
    %v996 = vpop.f32.mrb[0].mxu0
    %v997 = vpop.f32.mrb[0].mxu0
    %v998 = vadd.f32 %v894, %v997
    %v999 = vpop.f32.mrb[0].mxu0
    %1000 = vmatprep.mubr.bf16.mxu0 0
    %1001 = vmatmul.mubr.bf16.gmra.mrb[0].mxu0 %v868
    %v1002 = vpop.f32.mrb[0].mxu0
    %v1003 = vadd.f32 %v894, %v1002
    %v1004 = vpop.f32.mrb[0].mxu0
    %v1005 = vpop.f32.mrb[0].mxu0
    %v1006 = vadd.f32 %v894, %v1005
    %v1007 = vpop.f32.mrb[0].mxu0
    %1008 = vmatprep.mubr.bf16.mxu0 0
    %1009 = vmatmul.mubr.bf16.gmra.mrb[0].mxu0 %v869
    %v1010 = vpop.f32.mrb[0].mxu0
    %v1011 = vadd.f32 %v894, %v1010
    %v1012 = vpop.f32.mrb[0].mxu0
    %v1013 = vpop.f32.mrb[0].mxu0
    %v1014 = vadd.f32 %v894, %v1013
    %v1015 = vpop.f32.mrb[0].mxu0
    %1016 = vmatprep.mubr.bf16.mxu0 0
    %1017 = vmatmul.mubr.bf16.gmra.mrb[0].mxu0 %v870
    %v1018 = vpop.f32.mrb[0].mxu0
    %v1019 = vadd.f32 %v894, %v1018
    %v1020 = vpop.f32.mrb[0].mxu0
    %v1021 = vpop.f32.mrb[0].mxu0
    %v1022 = vadd.f32 %v894, %v1021
    %v1023 = vpop.f32.mrb[0].mxu0
    %1024 = vmatprep.mubr.bf16.mxu0 0
    %1025 = vmatmul.mubr.bf16.gmra.mrb[0].mxu0 %v871
    %v1026 = vpop.f32.mrb[0].mxu0
    %v1027 = vadd.f32 %v894, %v1026
    %v1028 = vpop.f32.mrb[0].mxu0
    %v1029 = vpop.f32.mrb[0].mxu0
    %v1030 = vadd.f32 %v894, %v1029
    %v1031 = vpop.f32.mrb[0].mxu0
    %1032 = vmatprep.mubr.bf16.mxu0 0
    %1033 = vmatmul.mubr.bf16.gmra.mrb[0].mxu0 %v872
    %v1034 = vpop.f32.mrb[0].mxu0
    %v1035 = vadd.f32 %v894, %v1034
    %v1036 = vpop.f32.mrb[0].mxu0
    %v1037 = vpop.f32.mrb[0].mxu0
    %v1038 = vadd.f32 %v894, %v1037
    %v1039 = vpop.f32.mrb[0].mxu0
    %1040 = vdwg.mxu0
    %vm1041 = vcmask 31744
    %1042 = vst.msk [vmem:[%s11] sm:$0xff] %vm1041, %v979
    %1043 = vst.msk [vmem:[%s11 + $0x8] sm:$0xff] %vm1041, %v982
    %1044 = vst.msk [vmem:[%s11 + $0x10] sm:$0xff] %vm1041, %v987
    %1045 = vst.msk [vmem:[%s11 + $0x18] sm:$0xff] %vm1041, %v990
    %1046 = vst.msk [vmem:[%s11 + $0x20] sm:$0xff] %vm1041, %v995
    %1047 = vst.msk [vmem:[%s11 + $0x28] sm:$0xff] %vm1041, %v998
    %1048 = vst.msk [vmem:[%s11 + $0x30] sm:$0xff] %vm1041, %v1003
    %1049 = vst.msk [vmem:[%s11 + $0x38] sm:$0xff] %vm1041, %v1006
    %1050 = vst.msk [vmem:[%s11 + $0x40] sm:$0xff] %vm1041, %v1011
    %1051 = vst.msk [vmem:[%s11 + $0x48] sm:$0xff] %vm1041, %v1014
    %1052 = vst.msk [vmem:[%s11 + $0x50] sm:$0xff] %vm1041, %v1019
    %1053 = vst.msk [vmem:[%s11 + $0x58] sm:$0xff] %vm1041, %v1022
    %1054 = vst.msk [vmem:[%s11 + $0x60] sm:$0xff] %vm1041, %v1027
    %1055 = vst.msk [vmem:[%s11 + $0x68] sm:$0xff] %vm1041, %v1030
    %1056 = vst.msk [vmem:[%s11 + $0x70] sm:$0xff] %vm1041, %v1035
    %1057 = vst.msk [vmem:[%s11 + $0x78] sm:$0xff] %vm1041, %v1038
    // Predicated region
    $region58: #{tpu_custom_call.1} parent=1 // pred_check
      _
    $region59: #{tpu_custom_call.1} parent=1 // pred_check_branch
      %1059 = sbr.rel (0) target = $region61
    $region60: #{tpu_custom_call.1} parent=1 // pred_region
      _
    $region61: #{tpu_custom_call.1} parent=1 // pred_fallthru
      _
    // Predicated region
    $region62: #{tpu_custom_call.1} parent=1 // pred_check
      _
    $region63: #{tpu_custom_call.1} parent=1 // pred_check_branch
      %1061 = sbr.rel (0) target = $region65
    $region64: #{tpu_custom_call.1} parent=1 // pred_region
      _
    $region65: #{tpu_custom_call.1} parent=1 // pred_fallthru
      _
    %1062 = vsyncpa [#allocation3], 1
    %1063 = vsyncpa [#allocation5], 1

// kernel: tpu_custom_call.1
$region0: #{tpu_custom_call.1}
  #allocation0 [shape = 'u32[]', space=smem, size = 0x4, offset = 0x4, fixed_abs, tag = 'smem constant byte address 0x4 - core index']
  #allocation1 [shape = 'u32[144,128]{1,0:T(1,128)}', space=vmem, size = 0x12000, scoped, tag = 'internal scratch']
  %s0 = inlined_call_operand.vmem [shape: bf16[128,16], index: 0, kind: input, shape index: {}]
  %s1 = inlined_call_operand.vmem [shape: bf16[16,128], index: 1, kind: input, shape index: {}]
  %s2 = inlined_call_operand.vmem [shape: f32[1,128], index: 2, kind: input, shape index: {}]
  %s3 = inlined_call_operand.vmem [shape: bf16[128,128], index: 3, kind: input, shape index: {}]
  %s4 = inlined_call_operand.vmem [shape: f32[1,128], index: 4, kind: input, shape index: {}]
  %s5 = inlined_call_operand.hbm [shape: bf16[128,128], index: 5, kind: input, shape index: {}]
  %s6 = inlined_call_operand.vmem [shape: f32[1,128], index: 6, kind: input, shape index: {}]
  %s7 = inlined_call_operand.hbm [shape: bf16[128,128], index: 7, kind: input, shape index: {}]
  %s8 = inlined_call_operand.vmem [shape: f32[1,128], index: 8, kind: input, shape index: {}]
  %s9 = inlined_call_operand.hbm [shape: bf16[128,128], index: 9, kind: input, shape index: {}]
  %s10 = inlined_call_operand.vmem [shape: f32[1,128], index: 10, kind: input, shape index: {}]
  %s11 = inlined_call_operand.vmem [shape: f32[128,4], index: 11, kind: output, shape index: {}]
  %s12 = sld [smem:[#allocation0]]
  $region66: #{tpu_custom_call.1} parent=0
    _
  %s14 = ssub.s32 1, %s12
  %s15 = scalar_select 0, %s14, %s12
  $region1: #{tpu_custom_call.1} parent=0
    #allocation2 [shape = 'u8[32768]{0}', space=vmem, size = 0x8000, scoped, tag = 'input window, operand 5, single buffered']
    #allocation3 [shape = 's32[1]{0}', space=sflag, size = 0x4, scoped, tag = 'scoped memory for tpu_custom_call.1']
    #allocation4 [shape = 'u8[32768]{0}', space=vmem, size = 0x8000, scoped, tag = 'input window, operand 7, single buffered']
    #allocation5 [shape = 's32[1]{0}', space=sflag, size = 0x4, scoped, tag = 'scoped memory for tpu_custom_call.1']
    #allocation6 [shape = 'u8[32768]{0}', space=vmem, size = 0x8000, scoped, tag = 'input window, operand 9, single buffered']
    %16 = vsyncpa [#allocation3], 0
    %17 = vsyncpa [#allocation5], 0
    // Predicated region
    $region2: #{tpu_custom_call.1} parent=1 // pred_check
      _
    $region3: #{tpu_custom_call.1} parent=1 // pred_check_branch
      %19 = sbr.rel (0) target = $region5
    $region4: #{tpu_custom_call.1} parent=1 // pred_region
      _
    $region5: #{tpu_custom_call.1} parent=1 // pred_fallthru
      _
    // Predicated region
    $region6: #{tpu_custom_call.1} parent=1 // pred_check
      _
    $region7: #{tpu_custom_call.1} parent=1 // pred_check_branch
      %21 = sbr.rel (0) target = $region9
    $region8: #{tpu_custom_call.1} parent=1 // pred_region
      _
    $region9: #{tpu_custom_call.1} parent=1 // pred_fallthru
      _
    // Predicated region
    $region10: #{tpu_custom_call.1} parent=1 // pred_check
      _
    $region11: #{tpu_custom_call.1} parent=1 // pred_check_branch
      %23 = sbr.rel (0) target = $region13
    $region12: #{tpu_custom_call.1} parent=1 // pred_region
      _
    $region13: #{tpu_custom_call.1} parent=1 // pred_fallthru
      _
    // Predicated region
    $region14: #{tpu_custom_call.1} parent=1 // pred_check
      _
    $region15: #{tpu_custom_call.1} parent=1 // pred_check_branch
      %25 = sbr.rel (0) target = $region17
    $region16: #{tpu_custom_call.1} parent=1 // pred_region
      _
    $region17: #{tpu_custom_call.1} parent=1 // pred_fallthru
      _
    // Predicated region
    $region18: #{tpu_custom_call.1} parent=1 // pred_check
      _
    $region19: #{tpu_custom_call.1} parent=1 // pred_check_branch
      %27 = sbr.rel (0) target = $region21
    $region20: #{tpu_custom_call.1} parent=1 // pred_region
      _
    $region21: #{tpu_custom_call.1} parent=1 // pred_fallthru
      _
    // Predicated region
    $region22: #{tpu_custom_call.1} parent=1 // pred_check
      _
    $region23: #{tpu_custom_call.1} parent=1 // pred_check_branch
      %29 = sbr.rel (0) target = $region25
    $region24: #{tpu_custom_call.1} parent=1 // pred_region
      %s31 = ssub.s32 1024, 1024
      %32 = vsyncadd [#allocation3], %s31
      %s33 = sshll.u32 [#allocation2], 4
      %s34 = int_to_ptr.vmem [resolvable:$true] %s33
      %39 = dma.hbm_to_vmem [thread:$0]  %s5, 1024, %s34, [#allocation3], 64, 64, 4
    $region25: #{tpu_custom_call.1} parent=1 // pred_fallthru
      _
    // Predicated region
    $region26: #{tpu_custom_call.1} parent=1 // pred_check
      _
    $region27: #{tpu_custom_call.1} parent=1 // pred_check_branch
      %41 = sbr.rel (0) target = $region29
    $region28: #{tpu_custom_call.1} parent=1 // pred_region
      _
    $region29: #{tpu_custom_call.1} parent=1 // pred_fallthru
      _
    // Predicated region
    $region30: #{tpu_custom_call.1} parent=1 // pred_check
      _
    $region31: #{tpu_custom_call.1} parent=1 // pred_check_branch
      %43 = sbr.rel (0) target = $region33
    $region32: #{tpu_custom_call.1} parent=1 // pred_region
      %s45 = ssub.s32 1024, 1024
      %46 = vsyncadd [#allocation5], %s45
      %s47 = sshll.u32 [#allocation4], 4
      %s48 = int_to_ptr.vmem [resolvable:$true] %s47
      %53 = dma.hbm_to_vmem [thread:$0]  %s7, 1024, %s48, [#allocation5], 64, 64, 4
    $region33: #{tpu_custom_call.1} parent=1 // pred_fallthru
      _
    // Predicated region
    $region34: #{tpu_custom_call.1} parent=1 // pred_check
      _
    $region35: #{tpu_custom_call.1} parent=1 // pred_check_branch
      %55 = sbr.rel (0) target = $region37
    $region36: #{tpu_custom_call.1} parent=1 // pred_region
      _
    $region37: #{tpu_custom_call.1} parent=1 // pred_fallthru
      _
    // Predicated region
    $region38: #{tpu_custom_call.1} parent=1 // pred_check
      _
    $region39: #{tpu_custom_call.1} parent=1 // pred_check_branch
      %57 = sbr.rel (0) target = $region41
    $region40: #{tpu_custom_call.1} parent=1 // pred_region
      %s59 = ssub.s32 1024, 1024
      %60 = vsyncadd [#allocation5], %s59
      %s61 = sshll.u32 [#allocation6], 4
      %s62 = int_to_ptr.vmem [resolvable:$true] %s61
      %67 = dma.hbm_to_vmem [thread:$0]  %s9, 1024, %s62, [#allocation5], 64, 64, 4
    $region41: #{tpu_custom_call.1} parent=1 // pred_fallthru
      _
    // Predicated region
    $region42: #{tpu_custom_call.1} parent=1 // pred_check
      _
    $region43: #{tpu_custom_call.1} parent=1 // pred_check_branch
      %69 = sbr.rel (0) target = $region45
    $region44: #{tpu_custom_call.1} parent=1 // pred_region
      _
    $region45: #{tpu_custom_call.1} parent=1 // pred_fallthru
      _
    // Predicated region
    $region46: #{tpu_custom_call.1} parent=1 // pred_check
      _
    $region47: #{tpu_custom_call.1} parent=1 // pred_check_branch
      %71 = sbr.rel (0) target = $region49
    $region48: #{tpu_custom_call.1} parent=1 // pred_region
      %72 = dma.done [#allocation3], 1024
    $region49: #{tpu_custom_call.1} parent=1 // pred_fallthru
      _
    // Predicated region
    $region50: #{tpu_custom_call.1} parent=1 // pred_check
      _
    $region51: #{tpu_custom_call.1} parent=1 // pred_check_branch
      %74 = sbr.rel (0) target = $region53
    $region52: #{tpu_custom_call.1} parent=1 // pred_region
      %75 = dma.done [#allocation5], 1024
    $region53: #{tpu_custom_call.1} parent=1 // pred_fallthru
      _
    // Predicated region
    $region54: #{tpu_custom_call.1} parent=1 // pred_check
      _
    $region55: #{tpu_custom_call.1} parent=1 // pred_check_branch
      %77 = sbr.rel (0) target = $region57
    $region56: #{tpu_custom_call.1} parent=1 // pred_region
      %78 = dma.done [#allocation5], 1024
    $region57: #{tpu_custom_call.1} parent=1 // pred_fallthru
      _
    %v80 = vld [vmem:[%s0] sm:$0xf]
    %v81 = vld [vmem:[%s0 + $0x4] sm:$0xf]
    %v82 = vld [vmem:[%s0 + $0x8] sm:$0xf]
    %v83 = vld [vmem:[%s0 + $0xc] sm:$0xf]
    %v84 = vld [vmem:[%s0 + $0x10] sm:$0xf]
    %v85 = vld [vmem:[%s0 + $0x14] sm:$0xf]
    %v86 = vld [vmem:[%s0 + $0x18] sm:$0xf]
    %v87 = vld [vmem:[%s0 + $0x1c] sm:$0xf]
    %v88 = vld [vmem:[%s0 + $0x20] sm:$0xf]
    %v89 = vld [vmem:[%s0 + $0x24] sm:$0xf]
    %v90 = vld [vmem:[%s0 + $0x28] sm:$0xf]
    %v91 = vld [vmem:[%s0 + $0x2c] sm:$0xf]
    %v92 = vld [vmem:[%s0 + $0x30] sm:$0xf]
    %v93 = vld [vmem:[%s0 + $0x34] sm:$0xf]
    %v94 = vld [vmem:[%s0 + $0x38] sm:$0xf]
    %v95 = vld [vmem:[%s0 + $0x3c] sm:$0xf]
    %v96 = vld [vmem:[%s1] sm:$0xf]
    %v97 = vld [vmem:[%s1 + $0x4] sm:$0xf]
    %v98 = vld [vmem:[%s2] sm:$0x1]
    %v100 = vlaneseq
    %v101 = vshrl.u32 %v100, 7
    %v102 = vsub.s32 0, %v101
    %v103 = vrot.slane %v98, %v102
    %v121 = vunpack.c.l.b16 %v80
    %v122 = vunpack.c.l.b16 %v81
    %v123 = vunpack.c.l.b16 %v82
    %v124 = vunpack.c.l.b16 %v83
    %v125 = vunpack.c.l.b16 %v84
    %v126 = vunpack.c.l.b16 %v85
    %v127 = vunpack.c.l.b16 %v86
    %v128 = vunpack.c.l.b16 %v87
    %v129 = vunpack.c.l.b16 %v88
    %v130 = vunpack.c.l.b16 %v89
    %v131 = vunpack.c.l.b16 %v90
    %v132 = vunpack.c.l.b16 %v91
    %v133 = vunpack.c.l.b16 %v92
    %v134 = vunpack.c.l.b16 %v93
    %v135 = vunpack.c.l.b16 %v94
    %v136 = vunpack.c.l.b16 %v95
    %v137 = vpack.c.b16 %v122, %v121
    %v138 = vpack.c.b16 %v124, %v123
    %v139 = vpack.c.b16 %v126, %v125
    %v140 = vpack.c.b16 %v128, %v127
    %v141 = vpack.c.b16 %v130, %v129
    %v142 = vpack.c.b16 %v132, %v131
    %v143 = vpack.c.b16 %v134, %v133
    %v144 = vpack.c.b16 %v136, %v135
    %v147 = vunpack.c.l.b16 %v96
    %v148 = vunpack.c.l.b16 %v97
    %v149 = vpack.c.b16 %v148, %v147
    %vm151 = vcmask 130048
    %v153 = vsel %vm151, %v137, 0
    %v156 = vsel %vm151, %v138, 0
    %v159 = vsel %vm151, %v139, 0
    %v162 = vsel %vm151, %v140, 0
    %v165 = vsel %vm151, %v141, 0
    %v168 = vsel %vm151, %v142, 0
    %v171 = vsel %vm151, %v143, 0
    %v174 = vsel %vm151, %v144, 0
    %176 = vmatprep.subr.bf16.mxu0 0
    %177 = vmatpush1.bf16.msra.mxu0 %v149
    %178 = vmatprep.subr.bf16.mxu0 0
    %179 = vmatpush1.bf16.msra.mxu0 0
    %180 = vmatprep.subr.bf16.mxu0 0
    %181 = vmatpush1.bf16.msra.mxu0 0
    %182 = vmatprep.subr.bf16.mxu0 0
    %183 = vmatpush1.bf16.msra.mxu0 0
    %184 = vmatprep.subr.bf16.mxu0 0
    %185 = vmatpush1.bf16.msra.mxu0 0
    %186 = vmatprep.subr.bf16.mxu0 0
    %187 = vmatpush1.bf16.msra.mxu0 0
    %188 = vmatprep.subr.bf16.mxu0 0
    %189 = vmatpush1.bf16.msra.mxu0 0
    %190 = vmatprep.subr.bf16.mxu0 0
    %191 = vmatpush1.bf16.msra.mxu0 0
    %192 = vmatprep.subr.bf16.mxu0 0
    %193 = vmatpush1.bf16.msra.mxu0 0
    %194 = vmatprep.subr.bf16.mxu0 0
    %195 = vmatpush1.bf16.msra.mxu0 0
    %196 = vmatprep.subr.bf16.mxu0 0
    %197 = vmatpush1.bf16.msra.mxu0 0
    %198 = vmatprep.subr.bf16.mxu0 0
    %199 = vmatpush1.bf16.msra.mxu0 0
    %200 = vmatprep.subr.bf16.mxu0 0
    %201 = vmatpush1.bf16.msra.mxu0 0
    %202 = vmatprep.subr.bf16.mxu0 0
    %203 = vmatpush1.bf16.msra.mxu0 0
    %204 = vmatprep.subr.bf16.mxu0 0
    %205 = vmatpush1.bf16.msra.mxu0 0
    %206 = vmatprep.subr.bf16.mxu0 0
    %207 = vmatpush1.bf16.msra.mxu0 0
    %208 = vmatprep.mubr.bf16.mxu0 0
    %209 = vmatmul.mubr.bf16.gmra.mrb[0].mxu0 %v153
    %v210 = vpop.f32.mrb[0].mxu0
    %v211 = vadd.f32 %v103, %v210
    %v212 = vpop.f32.mrb[0].mxu0
    %v213 = vpop.f32.mrb[0].mxu0
    %v214 = vadd.f32 %v103, %v213
    %v215 = vpop.f32.mrb[0].mxu0
    %216 = vmatprep.mubr.bf16.mxu0 0
    %217 = vmatmul.mubr.bf16.gmra.mrb[0].mxu0 %v156
    %v218 = vpop.f32.mrb[0].mxu0
    %v219 = vadd.f32 %v103, %v218
    %v220 = vpop.f32.mrb[0].mxu0
    %v221 = vpop.f32.mrb[0].mxu0
    %v222 = vadd.f32 %v103, %v221
    %v223 = vpop.f32.mrb[0].mxu0
    %224 = vmatprep.mubr.bf16.mxu0 0
    %225 = vmatmul.mubr.bf16.gmra.mrb[0].mxu0 %v159
    %v226 = vpop.f32.mrb[0].mxu0
    %v227 = vadd.f32 %v103, %v226
    %v228 = vpop.f32.mrb[0].mxu0
    %v229 = vpop.f32.mrb[0].mxu0
    %v230 = vadd.f32 %v103, %v229
    %v231 = vpop.f32.mrb[0].mxu0
    %232 = vmatprep.mubr.bf16.mxu0 0
    %233 = vmatmul.mubr.bf16.gmra.mrb[0].mxu0 %v162
    %v234 = vpop.f32.mrb[0].mxu0
    %v235 = vadd.f32 %v103, %v234
    %v236 = vpop.f32.mrb[0].mxu0
    %v237 = vpop.f32.mrb[0].mxu0
    %v238 = vadd.f32 %v103, %v237
    %v239 = vpop.f32.mrb[0].mxu0
    %240 = vmatprep.mubr.bf16.mxu0 0
    %241 = vmatmul.mubr.bf16.gmra.mrb[0].mxu0 %v165
    %v242 = vpop.f32.mrb[0].mxu0
    %v243 = vadd.f32 %v103, %v242
    %v244 = vpop.f32.mrb[0].mxu0
    %v245 = vpop.f32.mrb[0].mxu0
    %v246 = vadd.f32 %v103, %v245
    %v247 = vpop.f32.mrb[0].mxu0
    %248 = vmatprep.mubr.bf16.mxu0 0
    %249 = vmatmul.mubr.bf16.gmra.mrb[0].mxu0 %v168
    %v250 = vpop.f32.mrb[0].mxu0
    %v251 = vadd.f32 %v103, %v250
    %v252 = vpop.f32.mrb[0].mxu0
    %v253 = vpop.f32.mrb[0].mxu0
    %v254 = vadd.f32 %v103, %v253
    %v255 = vpop.f32.mrb[0].mxu0
    %256 = vmatprep.mubr.bf16.mxu0 0
    %257 = vmatmul.mubr.bf16.gmra.mrb[0].mxu0 %v171
    %v258 = vpop.f32.mrb[0].mxu0
    %v259 = vadd.f32 %v103, %v258
    %v260 = vpop.f32.mrb[0].mxu0
    %v261 = vpop.f32.mrb[0].mxu0
    %v262 = vadd.f32 %v103, %v261
    %v263 = vpop.f32.mrb[0].mxu0
    %264 = vmatprep.mubr.bf16.mxu0 0
    %265 = vmatmul.mubr.bf16.gmra.mrb[0].mxu0 %v174
    %v266 = vpop.f32.mrb[0].mxu0
    %v267 = vadd.f32 %v103, %v266
    %v268 = vpop.f32.mrb[0].mxu0
    %v269 = vpop.f32.mrb[0].mxu0
    %v270 = vadd.f32 %v103, %v269
    %v271 = vpop.f32.mrb[0].mxu0
    %272 = vdwg.mxu0
    %v273 = vmax.f32 %v211, 0.0
    %v274 = vmax.f32 %v214, 0.0
    %v275 = vmax.f32 %v219, 0.0
    %v276 = vmax.f32 %v222, 0.0
    %v277 = vmax.f32 %v227, 0.0
    %v278 = vmax.f32 %v230, 0.0
    %v279 = vmax.f32 %v235, 0.0
    %v280 = vmax.f32 %v238, 0.0
    %v281 = vmax.f32 %v243, 0.0
    %v282 = vmax.f32 %v246, 0.0
    %v283 = vmax.f32 %v251, 0.0
    %v284 = vmax.f32 %v254, 0.0
    %v285 = vmax.f32 %v259, 0.0
    %v286 = vmax.f32 %v262, 0.0
    %v287 = vmax.f32 %v267, 0.0
    %v288 = vmax.f32 %v270, 0.0
    %v289 = vpack.c.bf16 %v274, %v273
    %v290 = vpack.c.bf16 %v276, %v275
    %v291 = vpack.c.bf16 %v278, %v277
    %v292 = vpack.c.bf16 %v280, %v279
    %v293 = vpack.c.bf16 %v282, %v281
    %v294 = vpack.c.bf16 %v284, %v283
    %v295 = vpack.c.bf16 %v286, %v285
    %v296 = vpack.c.bf16 %v288, %v287
    %v297 = vld [vmem:[%s3] sm:$0xf]
    %v298 = vld [vmem:[%s3 + $0x4] sm:$0xf]
    %v299 = vld [vmem:[%s3 + $0x8] sm:$0xf]
    %v300 = vld [vmem:[%s3 + $0xc] sm:$0xf]
    %v301 = vld [vmem:[%s3 + $0x10] sm:$0xf]
    %v302 = vld [vmem:[%s3 + $0x14] sm:$0xf]
    %v303 = vld [vmem:[%s3 + $0x18] sm:$0xf]
    %v304 = vld [vmem:[%s3 + $0x1c] sm:$0xf]
    %v305 = vld [vmem:[%s3 + $0x20] sm:$0xf]
    %v306 = vld [vmem:[%s3 + $0x24] sm:$0xf]
    %v307 = vld [vmem:[%s3 + $0x28] sm:$0xf]
    %v308 = vld [vmem:[%s3 + $0x2c] sm:$0xf]
    %v309 = vld [vmem:[%s3 + $0x30] sm:$0xf]
    %v310 = vld [vmem:[%s3 + $0x34] sm:$0xf]
    %v311 = vld [vmem:[%s3 + $0x38] sm:$0xf]
    %v312 = vld [vmem:[%s3 + $0x3c] sm:$0xf]
    %v313 = vld [vmem:[%s4] sm:$0x1]
    %v315 = vlaneseq
    %v316 = vshrl.u32 %v315, 7
    %v317 = vsub.s32 0, %v316
    %v318 = vrot.slane %v313, %v317
    %v336 = vunpack.c.l.b16 %v297
    %v337 = vunpack.c.l.b16 %v298
    %v338 = vunpack.c.l.b16 %v299
    %v339 = vunpack.c.l.b16 %v300
    %v340 = vunpack.c.l.b16 %v301
    %v341 = vunpack.c.l.b16 %v302
    %v342 = vunpack.c.l.b16 %v303
    %v343 = vunpack.c.l.b16 %v304
    %v344 = vunpack.c.l.b16 %v305
    %v345 = vunpack.c.l.b16 %v306
    %v346 = vunpack.c.l.b16 %v307
    %v347 = vunpack.c.l.b16 %v308
    %v348 = vunpack.c.l.b16 %v309
    %v349 = vunpack.c.l.b16 %v310
    %v350 = vunpack.c.l.b16 %v311
    %v351 = vunpack.c.l.b16 %v312
    %v352 = vpack.c.b16 %v337, %v336
    %v353 = vpack.c.b16 %v339, %v338
    %v354 = vpack.c.b16 %v341, %v340
    %v355 = vpack.c.b16 %v343, %v342
    %v356 = vpack.c.b16 %v345, %v344
    %v357 = vpack.c.b16 %v347, %v346
    %v358 = vpack.c.b16 %v349, %v348
    %v359 = vpack.c.b16 %v351, %v350
    %368 = vmatprep.subr.bf16.mxu0 0
    %369 = vmatpush1.bf16.msra.mxu0 %v352
    %370 = vmatprep.subr.bf16.mxu0 0
    %371 = vmatpush1.bf16.msra.mxu0 %v353
    %372 = vmatprep.subr.bf16.mxu0 0
    %373 = vmatpush1.bf16.msra.mxu0 %v354
    %374 = vmatprep.subr.bf16.mxu0 0
    %375 = vmatpush1.bf16.msra.mxu0 %v355
    %376 = vmatprep.subr.bf16.mxu0 0
    %377 = vmatpush1.bf16.msra.mxu0 %v356
    %378 = vmatprep.subr.bf16.mxu0 0
    %379 = vmatpush1.bf16.msra.mxu0 %v357
    %380 = vmatprep.subr.bf16.mxu0 0
    %381 = vmatpush1.bf16.msra.mxu0 %v358
    %382 = vmatprep.subr.bf16.mxu0 0
    %383 = vmatpush1.bf16.msra.mxu0 %v359
    %384 = vmatprep.subr.bf16.mxu0 0
    %385 = vmatpush1.bf16.msra.mxu0 0
    %386 = vmatprep.subr.bf16.mxu0 0
    %387 = vmatpush1.bf16.msra.mxu0 0
    %388 = vmatprep.subr.bf16.mxu0 0
    %389 = vmatpush1.bf16.msra.mxu0 0
    %390 = vmatprep.subr.bf16.mxu0 0
    %391 = vmatpush1.bf16.msra.mxu0 0
    %392 = vmatprep.subr.bf16.mxu0 0
    %393 = vmatpush1.bf16.msra.mxu0 0
    %394 = vmatprep.subr.bf16.mxu0 0
    %395 = vmatpush1.bf16.msra.mxu0 0
    %396 = vmatprep.subr.bf16.mxu0 0
    %397 = vmatpush1.bf16.msra.mxu0 0
    %398 = vmatprep.subr.bf16.mxu0 0
    %399 = vmatpush1.bf16.msra.mxu0 0
    %400 = vmatprep.mubr.bf16.mxu0 0
    %401 = vmatmul.mubr.bf16.gmra.mrb[0].mxu0 %v289
    %v402 = vpop.f32.mrb[0].mxu0
    %v403 = vadd.f32 %v318, %v402
    %v404 = vpop.f32.mrb[0].mxu0
    %v405 = vpop.f32.mrb[0].mxu0
    %v406 = vadd.f32 %v318, %v405
    %v407 = vpop.f32.mrb[0].mxu0
    %408 = vmatprep.mubr.bf16.mxu0 0
    %409 = vmatmul.mubr.bf16.gmra.mrb[0].mxu0 %v290
    %v410 = vpop.f32.mrb[0].mxu0
    %v411 = vadd.f32 %v318, %v410
    %v412 = vpop.f32.mrb[0].mxu0
    %v413 = vpop.f32.mrb[0].mxu0
    %v414 = vadd.f32 %v318, %v413
    %v415 = vpop.f32.mrb[0].mxu0
    %416 = vmatprep.mubr.bf16.mxu0 0
    %417 = vmatmul.mubr.bf16.gmra.mrb[0].mxu0 %v291
    %v418 = vpop.f32.mrb[0].mxu0
    %v419 = vadd.f32 %v318, %v418
    %v420 = vpop.f32.mrb[0].mxu0
    %v421 = vpop.f32.mrb[0].mxu0
    %v422 = vadd.f32 %v318, %v421
    %v423 = vpop.f32.mrb[0].mxu0
    %424 = vmatprep.mubr.bf16.mxu0 0
    %425 = vmatmul.mubr.bf16.gmra.mrb[0].mxu0 %v292
    %v426 = vpop.f32.mrb[0].mxu0
    %v427 = vadd.f32 %v318, %v426
    %v428 = vpop.f32.mrb[0].mxu0
    %v429 = vpop.f32.mrb[0].mxu0
    %v430 = vadd.f32 %v318, %v429
    %v431 = vpop.f32.mrb[0].mxu0
    %432 = vmatprep.mubr.bf16.mxu0 0
    %433 = vmatmul.mubr.bf16.gmra.mrb[0].mxu0 %v293
    %v434 = vpop.f32.mrb[0].mxu0
    %v435 = vadd.f32 %v318, %v434
    %v436 = vpop.f32.mrb[0].mxu0
    %v437 = vpop.f32.mrb[0].mxu0
    %v438 = vadd.f32 %v318, %v437
    %v439 = vpop.f32.mrb[0].mxu0
    %440 = vmatprep.mubr.bf16.mxu0 0
    %441 = vmatmul.mubr.bf16.gmra.mrb[0].mxu0 %v294
    %v442 = vpop.f32.mrb[0].mxu0
    %v443 = vadd.f32 %v318, %v442
    %v444 = vpop.f32.mrb[0].mxu0
    %v445 = vpop.f32.mrb[0].mxu0
    %v446 = vadd.f32 %v318, %v445
    %v447 = vpop.f32.mrb[0].mxu0
    %448 = vmatprep.mubr.bf16.mxu0 0
    %449 = vmatmul.mubr.bf16.gmra.mrb[0].mxu0 %v295
    %v450 = vpop.f32.mrb[0].mxu0
    %v451 = vadd.f32 %v318, %v450
    %v452 = vpop.f32.mrb[0].mxu0
    %v453 = vpop.f32.mrb[0].mxu0
    %v454 = vadd.f32 %v318, %v453
    %v455 = vpop.f32.mrb[0].mxu0
    %456 = vmatprep.mubr.bf16.mxu0 0
    %457 = vmatmul.mubr.bf16.gmra.mrb[0].mxu0 %v296
    %v458 = vpop.f32.mrb[0].mxu0
    %v459 = vadd.f32 %v318, %v458
    %v460 = vpop.f32.mrb[0].mxu0
    %v461 = vpop.f32.mrb[0].mxu0
    %v462 = vadd.f32 %v318, %v461
    %v463 = vpop.f32.mrb[0].mxu0
    %464 = vdwg.mxu0
    %v465 = vmax.f32 %v403, 0.0
    %v466 = vmax.f32 %v406, 0.0
    %v467 = vmax.f32 %v411, 0.0
    %v468 = vmax.f32 %v414, 0.0
    %v469 = vmax.f32 %v419, 0.0
    %v470 = vmax.f32 %v422, 0.0
    %v471 = vmax.f32 %v427, 0.0
    %v472 = vmax.f32 %v430, 0.0
    %v473 = vmax.f32 %v435, 0.0
    %v474 = vmax.f32 %v438, 0.0
    %v475 = vmax.f32 %v443, 0.0
    %v476 = vmax.f32 %v446, 0.0
    %v477 = vmax.f32 %v451, 0.0
    %v478 = vmax.f32 %v454, 0.0
    %v479 = vmax.f32 %v459, 0.0
    %v480 = vmax.f32 %v462, 0.0
    %v481 = vpack.c.bf16 %v466, %v465
    %v482 = vpack.c.bf16 %v468, %v467
    %v483 = vpack.c.bf16 %v470, %v469
    %v484 = vpack.c.bf16 %v472, %v471
    %v485 = vpack.c.bf16 %v474, %v473
    %v486 = vpack.c.bf16 %v476, %v475
    %v487 = vpack.c.bf16 %v478, %v477
    %v488 = vpack.c.bf16 %v480, %v479
    %v489 = vld [vmem:[#allocation2] sm:$0xf]
    %v490 = vld [vmem:[#allocation2 + $0x4] sm:$0xf]
    %v491 = vld [vmem:[#allocation2 + $0x8] sm:$0xf]
    %v492 = vld [vmem:[#allocation2 + $0xc] sm:$0xf]
    %v493 = vld [vmem:[#allocation2 + $0x10] sm:$0xf]
    %v494 = vld [vmem:[#allocation2 + $0x14] sm:$0xf]
    %v495 = vld [vmem:[#allocation2 + $0x18] sm:$0xf]
    %v496 = vld [vmem:[#allocation2 + $0x1c] sm:$0xf]
    %v497 = vld [vmem:[#allocation2 + $0x20] sm:$0xf]
    %v498 = vld [vmem:[#allocation2 + $0x24] sm:$0xf]
    %v499 = vld [vmem:[#allocation2 + $0x28] sm:$0xf]
    %v500 = vld [vmem:[#allocation2 + $0x2c] sm:$0xf]
    %v501 = vld [vmem:[#allocation2 + $0x30] sm:$0xf]
    %v502 = vld [vmem:[#allocation2 + $0x34] sm:$0xf]
    %v503 = vld [vmem:[#allocation2 + $0x38] sm:$0xf]
    %v504 = vld [vmem:[#allocation2 + $0x3c] sm:$0xf]
    %v505 = vld [vmem:[%s6] sm:$0x1]
    %v507 = vlaneseq
    %v508 = vshrl.u32 %v507, 7
    %v509 = vsub.s32 0, %v508
    %v510 = vrot.slane %v505, %v509
    %v528 = vunpack.c.l.b16 %v489
    %v529 = vunpack.c.l.b16 %v490
    %v530 = vunpack.c.l.b16 %v491
    %v531 = vunpack.c.l.b16 %v492
    %v532 = vunpack.c.l.b16 %v493
    %v533 = vunpack.c.l.b16 %v494
    %v534 = vunpack.c.l.b16 %v495
    %v535 = vunpack.c.l.b16 %v496
    %v536 = vunpack.c.l.b16 %v497
    %v537 = vunpack.c.l.b16 %v498
    %v538 = vunpack.c.l.b16 %v499
    %v539 = vunpack.c.l.b16 %v500
    %v540 = vunpack.c.l.b16 %v501
    %v541 = vunpack.c.l.b16 %v502
    %v542 = vunpack.c.l.b16 %v503
    %v543 = vunpack.c.l.b16 %v504
    %v544 = vpack.c.b16 %v529, %v528
    %v545 = vpack.c.b16 %v531, %v530
    %v546 = vpack.c.b16 %v533, %v532
    %v547 = vpack.c.b16 %v535, %v534
    %v548 = vpack.c.b16 %v537, %v536
    %v549 = vpack.c.b16 %v539, %v538
    %v550 = vpack.c.b16 %v541, %v540
    %v551 = vpack.c.b16 %v543, %v542
    %560 = vmatprep.subr.bf16.mxu0 0
    %561 = vmatpush1.bf16.msra.mxu0 %v544
    %562 = vmatprep.subr.bf16.mxu0 0
    %563 = vmatpush1.bf16.msra.mxu0 %v545
    %564 = vmatprep.subr.bf16.mxu0 0
    %565 = vmatpush1.bf16.msra.mxu0 %v546
    %566 = vmatprep.subr.bf16.mxu0 0
    %567 = vmatpush1.bf16.msra.mxu0 %v547
    %568 = vmatprep.subr.bf16.mxu0 0
    %569 = vmatpush1.bf16.msra.mxu0 %v548
    %570 = vmatprep.subr.bf16.mxu0 0
    %571 = vmatpush1.bf16.msra.mxu0 %v549
    %572 = vmatprep.subr.bf16.mxu0 0
    %573 = vmatpush1.bf16.msra.mxu0 %v550
    %574 = vmatprep.subr.bf16.mxu0 0
    %575 = vmatpush1.bf16.msra.mxu0 %v551
    %576 = vmatprep.subr.bf16.mxu0 0
    %577 = vmatpush1.bf16.msra.mxu0 0
    %578 = vmatprep.subr.bf16.mxu0 0
    %579 = vmatpush1.bf16.msra.mxu0 0
    %580 = vmatprep.subr.bf16.mxu0 0
    %581 = vmatpush1.bf16.msra.mxu0 0
    %582 = vmatprep.subr.bf16.mxu0 0
    %583 = vmatpush1.bf16.msra.mxu0 0
    %584 = vmatprep.subr.bf16.mxu0 0
    %585 = vmatpush1.bf16.msra.mxu0 0
    %586 = vmatprep.subr.bf16.mxu0 0
    %587 = vmatpush1.bf16.msra.mxu0 0
    %588 = vmatprep.subr.bf16.mxu0 0
    %589 = vmatpush1.bf16.msra.mxu0 0
    %590 = vmatprep.subr.bf16.mxu0 0
    %591 = vmatpush1.bf16.msra.mxu0 0
    %592 = vmatprep.mubr.bf16.mxu0 0
    %593 = vmatmul.mubr.bf16.gmra.mrb[0].mxu0 %v481
    %v594 = vpop.f32.mrb[0].mxu0
    %v595 = vadd.f32 %v510, %v594
    %v596 = vpop.f32.mrb[0].mxu0
    %v597 = vpop.f32.mrb[0].mxu0
    %v598 = vadd.f32 %v510, %v597
    %v599 = vpop.f32.mrb[0].mxu0
    %600 = vmatprep.mubr.bf16.mxu0 0
    %601 = vmatmul.mubr.bf16.gmra.mrb[0].mxu0 %v482
    %v602 = vpop.f32.mrb[0].mxu0
    %v603 = vadd.f32 %v510, %v602
    %v604 = vpop.f32.mrb[0].mxu0
    %v605 = vpop.f32.mrb[0].mxu0
    %v606 = vadd.f32 %v510, %v605
    %v607 = vpop.f32.mrb[0].mxu0
    %608 = vmatprep.mubr.bf16.mxu0 0
    %609 = vmatmul.mubr.bf16.gmra.mrb[0].mxu0 %v483
    %v610 = vpop.f32.mrb[0].mxu0
    %v611 = vadd.f32 %v510, %v610
    %v612 = vpop.f32.mrb[0].mxu0
    %v613 = vpop.f32.mrb[0].mxu0
    %v614 = vadd.f32 %v510, %v613
    %v615 = vpop.f32.mrb[0].mxu0
    %616 = vmatprep.mubr.bf16.mxu0 0
    %617 = vmatmul.mubr.bf16.gmra.mrb[0].mxu0 %v484
    %v618 = vpop.f32.mrb[0].mxu0
    %v619 = vadd.f32 %v510, %v618
    %v620 = vpop.f32.mrb[0].mxu0
    %v621 = vpop.f32.mrb[0].mxu0
    %v622 = vadd.f32 %v510, %v621
    %v623 = vpop.f32.mrb[0].mxu0
    %624 = vmatprep.mubr.bf16.mxu0 0
    %625 = vmatmul.mubr.bf16.gmra.mrb[0].mxu0 %v485
    %v626 = vpop.f32.mrb[0].mxu0
    %v627 = vadd.f32 %v510, %v626
    %v628 = vpop.f32.mrb[0].mxu0
    %v629 = vpop.f32.mrb[0].mxu0
    %v630 = vadd.f32 %v510, %v629
    %v631 = vpop.f32.mrb[0].mxu0
    %632 = vmatprep.mubr.bf16.mxu0 0
    %633 = vmatmul.mubr.bf16.gmra.mrb[0].mxu0 %v486
    %v634 = vpop.f32.mrb[0].mxu0
    %v635 = vadd.f32 %v510, %v634
    %v636 = vpop.f32.mrb[0].mxu0
    %v637 = vpop.f32.mrb[0].mxu0
    %v638 = vadd.f32 %v510, %v637
    %v639 = vpop.f32.mrb[0].mxu0
    %640 = vmatprep.mubr.bf16.mxu0 0
    %641 = vmatmul.mubr.bf16.gmra.mrb[0].mxu0 %v487
    %v642 = vpop.f32.mrb[0].mxu0
    %v643 = vadd.f32 %v510, %v642
    %v644 = vpop.f32.mrb[0].mxu0
    %v645 = vpop.f32.mrb[0].mxu0
    %v646 = vadd.f32 %v510, %v645
    %v647 = vpop.f32.mrb[0].mxu0
    %648 = vmatprep.mubr.bf16.mxu0 0
    %649 = vmatmul.mubr.bf16.gmra.mrb[0].mxu0 %v488
    %v650 = vpop.f32.mrb[0].mxu0
    %v651 = vadd.f32 %v510, %v650
    %v652 = vpop.f32.mrb[0].mxu0
    %v653 = vpop.f32.mrb[0].mxu0
    %v654 = vadd.f32 %v510, %v653
    %v655 = vpop.f32.mrb[0].mxu0
    %656 = vdwg.mxu0
    %v657 = vmax.f32 %v595, 0.0
    %v658 = vmax.f32 %v598, 0.0
    %v659 = vmax.f32 %v603, 0.0
    %v660 = vmax.f32 %v606, 0.0
    %v661 = vmax.f32 %v611, 0.0
    %v662 = vmax.f32 %v614, 0.0
    %v663 = vmax.f32 %v619, 0.0
    %v664 = vmax.f32 %v622, 0.0
    %v665 = vmax.f32 %v627, 0.0
    %v666 = vmax.f32 %v630, 0.0
    %v667 = vmax.f32 %v635, 0.0
    %v668 = vmax.f32 %v638, 0.0
    %v669 = vmax.f32 %v643, 0.0
    %v670 = vmax.f32 %v646, 0.0
    %v671 = vmax.f32 %v651, 0.0
    %v672 = vmax.f32 %v654, 0.0
    %v673 = vpack.c.bf16 %v658, %v657
    %v674 = vpack.c.bf16 %v660, %v659
    %v675 = vpack.c.bf16 %v662, %v661
    %v676 = vpack.c.bf16 %v664, %v663
    %v677 = vpack.c.bf16 %v666, %v665
    %v678 = vpack.c.bf16 %v668, %v667
    %v679 = vpack.c.bf16 %v670, %v669
    %v680 = vpack.c.bf16 %v672, %v671
    %v681 = vld [vmem:[#allocation4] sm:$0xf]
    %v682 = vld [vmem:[#allocation4 + $0x4] sm:$0xf]
    %v683 = vld [vmem:[#allocation4 + $0x8] sm:$0xf]
    %v684 = vld [vmem:[#allocation4 + $0xc] sm:$0xf]
    %v685 = vld [vmem:[#allocation4 + $0x10] sm:$0xf]
    %v686 = vld [vmem:[#allocation4 + $0x14] sm:$0xf]
    %v687 = vld [vmem:[#allocation4 + $0x18] sm:$0xf]
    %v688 = vld [vmem:[#allocation4 + $0x1c] sm:$0xf]
    %v689 = vld [vmem:[#allocation4 + $0x20] sm:$0xf]
    %v690 = vld [vmem:[#allocation4 + $0x24] sm:$0xf]
    %v691 = vld [vmem:[#allocation4 + $0x28] sm:$0xf]
    %v692 = vld [vmem:[#allocation4 + $0x2c] sm:$0xf]
    %v693 = vld [vmem:[#allocation4 + $0x30] sm:$0xf]
    %v694 = vld [vmem:[#allocation4 + $0x34] sm:$0xf]
    %v695 = vld [vmem:[#allocation4 + $0x38] sm:$0xf]
    %v696 = vld [vmem:[#allocation4 + $0x3c] sm:$0xf]
    %v697 = vld [vmem:[%s8] sm:$0x1]
    %v699 = vlaneseq
    %v700 = vshrl.u32 %v699, 7
    %v701 = vsub.s32 0, %v700
    %v702 = vrot.slane %v697, %v701
    %v720 = vunpack.c.l.b16 %v681
    %v721 = vunpack.c.l.b16 %v682
    %v722 = vunpack.c.l.b16 %v683
    %v723 = vunpack.c.l.b16 %v684
    %v724 = vunpack.c.l.b16 %v685
    %v725 = vunpack.c.l.b16 %v686
    %v726 = vunpack.c.l.b16 %v687
    %v727 = vunpack.c.l.b16 %v688
    %v728 = vunpack.c.l.b16 %v689
    %v729 = vunpack.c.l.b16 %v690
    %v730 = vunpack.c.l.b16 %v691
    %v731 = vunpack.c.l.b16 %v692
    %v732 = vunpack.c.l.b16 %v693
    %v733 = vunpack.c.l.b16 %v694
    %v734 = vunpack.c.l.b16 %v695
    %v735 = vunpack.c.l.b16 %v696
    %v736 = vpack.c.b16 %v721, %v720
    %v737 = vpack.c.b16 %v723, %v722
    %v738 = vpack.c.b16 %v725, %v724
    %v739 = vpack.c.b16 %v727, %v726
    %v740 = vpack.c.b16 %v729, %v728
    %v741 = vpack.c.b16 %v731, %v730
    %v742 = vpack.c.b16 %v733, %v732
    %v743 = vpack.c.b16 %v735, %v734
    %752 = vmatprep.subr.bf16.mxu0 0
    %753 = vmatpush1.bf16.msra.mxu0 %v736
    %754 = vmatprep.subr.bf16.mxu0 0
    %755 = vmatpush1.bf16.msra.mxu0 %v737
    %756 = vmatprep.subr.bf16.mxu0 0
    %757 = vmatpush1.bf16.msra.mxu0 %v738
    %758 = vmatprep.subr.bf16.mxu0 0
    %759 = vmatpush1.bf16.msra.mxu0 %v739
    %760 = vmatprep.subr.bf16.mxu0 0
    %761 = vmatpush1.bf16.msra.mxu0 %v740
    %762 = vmatprep.subr.bf16.mxu0 0
    %763 = vmatpush1.bf16.msra.mxu0 %v741
    %764 = vmatprep.subr.bf16.mxu0 0
    %765 = vmatpush1.bf16.msra.mxu0 %v742
    %766 = vmatprep.subr.bf16.mxu0 0
    %767 = vmatpush1.bf16.msra.mxu0 %v743
    %768 = vmatprep.subr.bf16.mxu0 0
    %769 = vmatpush1.bf16.msra.mxu0 0
    %770 = vmatprep.subr.bf16.mxu0 0
    %771 = vmatpush1.bf16.msra.mxu0 0
    %772 = vmatprep.subr.bf16.mxu0 0
    %773 = vmatpush1.bf16.msra.mxu0 0
    %774 = vmatprep.subr.bf16.mxu0 0
    %775 = vmatpush1.bf16.msra.mxu0 0
    %776 = vmatprep.subr.bf16.mxu0 0
    %777 = vmatpush1.bf16.msra.mxu0 0
    %778 = vmatprep.subr.bf16.mxu0 0
    %779 = vmatpush1.bf16.msra.mxu0 0
    %780 = vmatprep.subr.bf16.mxu0 0
    %781 = vmatpush1.bf16.msra.mxu0 0
    %782 = vmatprep.subr.bf16.mxu0 0
    %783 = vmatpush1.bf16.msra.mxu0 0
    %784 = vmatprep.mubr.bf16.mxu0 0
    %785 = vmatmul.mubr.bf16.gmra.mrb[0].mxu0 %v673
    %v786 = vpop.f32.mrb[0].mxu0
    %v787 = vadd.f32 %v702, %v786
    %v788 = vpop.f32.mrb[0].mxu0
    %v789 = vpop.f32.mrb[0].mxu0
    %v790 = vadd.f32 %v702, %v789
    %v791 = vpop.f32.mrb[0].mxu0
    %792 = vmatprep.mubr.bf16.mxu0 0
    %793 = vmatmul.mubr.bf16.gmra.mrb[0].mxu0 %v674
    %v794 = vpop.f32.mrb[0].mxu0
    %v795 = vadd.f32 %v702, %v794
    %v796 = vpop.f32.mrb[0].mxu0
    %v797 = vpop.f32.mrb[0].mxu0
    %v798 = vadd.f32 %v702, %v797
    %v799 = vpop.f32.mrb[0].mxu0
    %800 = vmatprep.mubr.bf16.mxu0 0
    %801 = vmatmul.mubr.bf16.gmra.mrb[0].mxu0 %v675
    %v802 = vpop.f32.mrb[0].mxu0
    %v803 = vadd.f32 %v702, %v802
    %v804 = vpop.f32.mrb[0].mxu0
    %v805 = vpop.f32.mrb[0].mxu0
    %v806 = vadd.f32 %v702, %v805
    %v807 = vpop.f32.mrb[0].mxu0
    %808 = vmatprep.mubr.bf16.mxu0 0
    %809 = vmatmul.mubr.bf16.gmra.mrb[0].mxu0 %v676
    %v810 = vpop.f32.mrb[0].mxu0
    %v811 = vadd.f32 %v702, %v810
    %v812 = vpop.f32.mrb[0].mxu0
    %v813 = vpop.f32.mrb[0].mxu0
    %v814 = vadd.f32 %v702, %v813
    %v815 = vpop.f32.mrb[0].mxu0
    %816 = vmatprep.mubr.bf16.mxu0 0
    %817 = vmatmul.mubr.bf16.gmra.mrb[0].mxu0 %v677
    %v818 = vpop.f32.mrb[0].mxu0
    %v819 = vadd.f32 %v702, %v818
    %v820 = vpop.f32.mrb[0].mxu0
    %v821 = vpop.f32.mrb[0].mxu0
    %v822 = vadd.f32 %v702, %v821
    %v823 = vpop.f32.mrb[0].mxu0
    %824 = vmatprep.mubr.bf16.mxu0 0
    %825 = vmatmul.mubr.bf16.gmra.mrb[0].mxu0 %v678
    %v826 = vpop.f32.mrb[0].mxu0
    %v827 = vadd.f32 %v702, %v826
    %v828 = vpop.f32.mrb[0].mxu0
    %v829 = vpop.f32.mrb[0].mxu0
    %v830 = vadd.f32 %v702, %v829
    %v831 = vpop.f32.mrb[0].mxu0
    %832 = vmatprep.mubr.bf16.mxu0 0
    %833 = vmatmul.mubr.bf16.gmra.mrb[0].mxu0 %v679
    %v834 = vpop.f32.mrb[0].mxu0
    %v835 = vadd.f32 %v702, %v834
    %v836 = vpop.f32.mrb[0].mxu0
    %v837 = vpop.f32.mrb[0].mxu0
    %v838 = vadd.f32 %v702, %v837
    %v839 = vpop.f32.mrb[0].mxu0
    %840 = vmatprep.mubr.bf16.mxu0 0
    %841 = vmatmul.mubr.bf16.gmra.mrb[0].mxu0 %v680
    %v842 = vpop.f32.mrb[0].mxu0
    %v843 = vadd.f32 %v702, %v842
    %v844 = vpop.f32.mrb[0].mxu0
    %v845 = vpop.f32.mrb[0].mxu0
    %v846 = vadd.f32 %v702, %v845
    %v847 = vpop.f32.mrb[0].mxu0
    %848 = vdwg.mxu0
    %v849 = vmax.f32 %v787, 0.0
    %v850 = vmax.f32 %v790, 0.0
    %v851 = vmax.f32 %v795, 0.0
    %v852 = vmax.f32 %v798, 0.0
    %v853 = vmax.f32 %v803, 0.0
    %v854 = vmax.f32 %v806, 0.0
    %v855 = vmax.f32 %v811, 0.0
    %v856 = vmax.f32 %v814, 0.0
    %v857 = vmax.f32 %v819, 0.0
    %v858 = vmax.f32 %v822, 0.0
    %v859 = vmax.f32 %v827, 0.0
    %v860 = vmax.f32 %v830, 0.0
    %v861 = vmax.f32 %v835, 0.0
    %v862 = vmax.f32 %v838, 0.0
    %v863 = vmax.f32 %v843, 0.0
    %v864 = vmax.f32 %v846, 0.0
    %v865 = vpack.c.bf16 %v850, %v849
    %v866 = vpack.c.bf16 %v852, %v851
    %v867 = vpack.c.bf16 %v854, %v853
    %v868 = vpack.c.bf16 %v856, %v855
    %v869 = vpack.c.bf16 %v858, %v857
    %v870 = vpack.c.bf16 %v860, %v859
    %v871 = vpack.c.bf16 %v862, %v861
    %v872 = vpack.c.bf16 %v864, %v863
    %v873 = vld [vmem:[#allocation6] sm:$0xf]
    %v874 = vld [vmem:[#allocation6 + $0x4] sm:$0xf]
    %v875 = vld [vmem:[#allocation6 + $0x8] sm:$0xf]
    %v876 = vld [vmem:[#allocation6 + $0xc] sm:$0xf]
    %v877 = vld [vmem:[#allocation6 + $0x10] sm:$0xf]
    %v878 = vld [vmem:[#allocation6 + $0x14] sm:$0xf]
    %v879 = vld [vmem:[#allocation6 + $0x18] sm:$0xf]
    %v880 = vld [vmem:[#allocation6 + $0x1c] sm:$0xf]
    %v881 = vld [vmem:[#allocation6 + $0x20] sm:$0xf]
    %v882 = vld [vmem:[#allocation6 + $0x24] sm:$0xf]
    %v883 = vld [vmem:[#allocation6 + $0x28] sm:$0xf]
    %v884 = vld [vmem:[#allocation6 + $0x2c] sm:$0xf]
    %v885 = vld [vmem:[#allocation6 + $0x30] sm:$0xf]
    %v886 = vld [vmem:[#allocation6 + $0x34] sm:$0xf]
    %v887 = vld [vmem:[#allocation6 + $0x38] sm:$0xf]
    %v888 = vld [vmem:[#allocation6 + $0x3c] sm:$0xf]
    %v889 = vld [vmem:[%s10] sm:$0x1]
    %v891 = vlaneseq
    %v892 = vshrl.u32 %v891, 7
    %v893 = vsub.s32 0, %v892
    %v894 = vrot.slane %v889, %v893
    %v912 = vunpack.c.l.b16 %v873
    %v913 = vunpack.c.l.b16 %v874
    %v914 = vunpack.c.l.b16 %v875
    %v915 = vunpack.c.l.b16 %v876
    %v916 = vunpack.c.l.b16 %v877
    %v917 = vunpack.c.l.b16 %v878
    %v918 = vunpack.c.l.b16 %v879
    %v919 = vunpack.c.l.b16 %v880
    %v920 = vunpack.c.l.b16 %v881
    %v921 = vunpack.c.l.b16 %v882
    %v922 = vunpack.c.l.b16 %v883
    %v923 = vunpack.c.l.b16 %v884
    %v924 = vunpack.c.l.b16 %v885
    %v925 = vunpack.c.l.b16 %v886
    %v926 = vunpack.c.l.b16 %v887
    %v927 = vunpack.c.l.b16 %v888
    %v928 = vpack.c.b16 %v913, %v912
    %v929 = vpack.c.b16 %v915, %v914
    %v930 = vpack.c.b16 %v917, %v916
    %v931 = vpack.c.b16 %v919, %v918
    %v932 = vpack.c.b16 %v921, %v920
    %v933 = vpack.c.b16 %v923, %v922
    %v934 = vpack.c.b16 %v925, %v924
    %v935 = vpack.c.b16 %v927, %v926
    %944 = vmatprep.subr.bf16.mxu0 0
    %945 = vmatpush1.bf16.msra.mxu0 %v928
    %946 = vmatprep.subr.bf16.mxu0 0
    %947 = vmatpush1.bf16.msra.mxu0 %v929
    %948 = vmatprep.subr.bf16.mxu0 0
    %949 = vmatpush1.bf16.msra.mxu0 %v930
    %950 = vmatprep.subr.bf16.mxu0 0
    %951 = vmatpush1.bf16.msra.mxu0 %v931
    %952 = vmatprep.subr.bf16.mxu0 0
    %953 = vmatpush1.bf16.msra.mxu0 %v932
    %954 = vmatprep.subr.bf16.mxu0 0
    %955 = vmatpush1.bf16.msra.mxu0 %v933
    %956 = vmatprep.subr.bf16.mxu0 0
    %957 = vmatpush1.bf16.msra.mxu0 %v934
    %958 = vmatprep.subr.bf16.mxu0 0
    %959 = vmatpush1.bf16.msra.mxu0 %v935
    %960 = vmatprep.subr.bf16.mxu0 0
    %961 = vmatpush1.bf16.msra.mxu0 0
    %962 = vmatprep.subr.bf16.mxu0 0
    %963 = vmatpush1.bf16.msra.mxu0 0
    %964 = vmatprep.subr.bf16.mxu0 0
    %965 = vmatpush1.bf16.msra.mxu0 0
    %966 = vmatprep.subr.bf16.mxu0 0
    %967 = vmatpush1.bf16.msra.mxu0 0
    %968 = vmatprep.subr.bf16.mxu0 0
    %969 = vmatpush1.bf16.msra.mxu0 0
    %970 = vmatprep.subr.bf16.mxu0 0
    %971 = vmatpush1.bf16.msra.mxu0 0
    %972 = vmatprep.subr.bf16.mxu0 0
    %973 = vmatpush1.bf16.msra.mxu0 0
    %974 = vmatprep.subr.bf16.mxu0 0
    %975 = vmatpush1.bf16.msra.mxu0 0
    %976 = vmatprep.mubr.bf16.mxu0 0
    %977 = vmatmul.mubr.bf16.gmra.mrb[0].mxu0 %v865
    %v978 = vpop.f32.mrb[0].mxu0
    %v979 = vadd.f32 %v894, %v978
    %v980 = vpop.f32.mrb[0].mxu0
    %v981 = vpop.f32.mrb[0].mxu0
    %v982 = vadd.f32 %v894, %v981
    %v983 = vpop.f32.mrb[0].mxu0
    %984 = vmatprep.mubr.bf16.mxu0 0
    %985 = vmatmul.mubr.bf16.gmra.mrb[0].mxu0 %v866
    %v986 = vpop.f32.mrb[0].mxu0
    %v987 = vadd.f32 %v894, %v986
    %v988 = vpop.f32.mrb[0].mxu0
    %v989 = vpop.f32.mrb[0].mxu0
    %v990 = vadd.f32 %v894, %v989
    %v991 = vpop.f32.mrb[0].mxu0
    %992 = vmatprep.mubr.bf16.mxu0 0
    %993 = vmatmul.mubr.bf16.gmra.mrb[0].mxu0 %v867
    %v994 = vpop.f32.mrb[0].mxu0
    %v995 = vadd.f32 %v894, %v994
    %v996 = vpop.f32.mrb[0].mxu0
    %v997 = vpop.f32.mrb[0].mxu0
    %v998 = vadd.f32 %v894, %v997
    %v999 = vpop.f32.mrb[0].mxu0
    %1000 = vmatprep.mubr.bf16.mxu0 0
    %1001 = vmatmul.mubr.bf16.gmra.mrb[0].mxu0 %v868
    %v1002 = vpop.f32.mrb[0].mxu0
    %v1003 = vadd.f32 %v894, %v1002
    %v1004 = vpop.f32.mrb[0].mxu0
    %v1005 = vpop.f32.mrb[0].mxu0
    %v1006 = vadd.f32 %v894, %v1005
    %v1007 = vpop.f32.mrb[0].mxu0
    %1008 = vmatprep.mubr.bf16.mxu0 0
    %1009 = vmatmul.mubr.bf16.gmra.mrb[0].mxu0 %v869
    %v1010 = vpop.f32.mrb[0].mxu0
    %v1011 = vadd.f32 %v894, %v1010
    %v1012 = vpop.f32.mrb[0].mxu0
    %v1013 = vpop.f32.mrb[0].mxu0
    %v1014 = vadd.f32 %v894, %v1013
    %v1015 = vpop.f32.mrb[0].mxu0
    %1016 = vmatprep.mubr.bf16.mxu0 0
    %1017 = vmatmul.mubr.bf16.gmra.mrb[0].mxu0 %v870
    %v1018 = vpop.f32.mrb[0].mxu0
    %v1019 = vadd.f32 %v894, %v1018
    %v1020 = vpop.f32.mrb[0].mxu0
    %v1021 = vpop.f32.mrb[0].mxu0
    %v1022 = vadd.f32 %v894, %v1021
    %v1023 = vpop.f32.mrb[0].mxu0
    %1024 = vmatprep.mubr.bf16.mxu0 0
    %1025 = vmatmul.mubr.bf16.gmra.mrb[0].mxu0 %v871
    %v1026 = vpop.f32.mrb[0].mxu0
    %v1027 = vadd.f32 %v894, %v1026
    %v1028 = vpop.f32.mrb[0].mxu0
    %v1029 = vpop.f32.mrb[0].mxu0
    %v1030 = vadd.f32 %v894, %v1029
    %v1031 = vpop.f32.mrb[0].mxu0
    %1032 = vmatprep.mubr.bf16.mxu0 0
    %1033 = vmatmul.mubr.bf16.gmra.mrb[0].mxu0 %v872
    %v1034 = vpop.f32.mrb[0].mxu0
    %v1035 = vadd.f32 %v894, %v1034
    %v1036 = vpop.f32.mrb[0].mxu0
    %v1037 = vpop.f32.mrb[0].mxu0
    %v1038 = vadd.f32 %v894, %v1037
    %v1039 = vpop.f32.mrb[0].mxu0
    %1040 = vdwg.mxu0
    %vm1041 = vcmask 31744
    %1042 = vst.msk [vmem:[%s11] sm:$0xff] %vm1041, %v979
    %1043 = vst.msk [vmem:[%s11 + $0x8] sm:$0xff] %vm1041, %v982
    %1044 = vst.msk [vmem:[%s11 + $0x10] sm:$0xff] %vm1041, %v987
    %1045 = vst.msk [vmem:[%s11 + $0x18] sm:$0xff] %vm1041, %v990
    %1046 = vst.msk [vmem:[%s11 + $0x20] sm:$0xff] %vm1041, %v995
    %1047 = vst.msk [vmem:[%s11 + $0x28] sm:$0xff] %vm1041, %v998
    %1048 = vst.msk [vmem:[%s11 + $0x30] sm:$0xff] %vm1041, %v1003
    %1049 = vst.msk [vmem:[%s11 + $0x38] sm:$0xff] %vm1041, %v1006
    %1050 = vst.msk [vmem:[%s11 + $0x40] sm:$0xff] %vm1041, %v1011
    %1051 = vst.msk [vmem:[%s11 + $0x48] sm:$0xff] %vm1041, %v1014
    %1052 = vst.msk [vmem:[%s11 + $0x50] sm:$0xff] %vm1041, %v1019
    %1053 = vst.msk [vmem:[%s11 + $0x58] sm:$0xff] %vm1041, %v1022
    %1054 = vst.msk [vmem:[%s11 + $0x60] sm:$0xff] %vm1041, %v1027
    %1055 = vst.msk [vmem:[%s11 + $0x68] sm:$0xff] %vm1041, %v1030
    %1056 = vst.msk [vmem:[%s11 + $0x70] sm:$0xff] %vm1041, %v1035
    %1057 = vst.msk [vmem:[%s11 + $0x78] sm:$0xff] %vm1041, %v1038
    // Predicated region
    $region58: #{tpu_custom_call.1} parent=1 // pred_check
      _
    $region59: #{tpu_custom_call.1} parent=1 // pred_check_branch
      %1059 = sbr.rel (0) target = $region61
    $region60: #{tpu_custom_call.1} parent=1 // pred_region
      _
    $region61: #{tpu_custom_call.1} parent=1 // pred_fallthru
      _
    // Predicated region
    $region62: #{tpu_custom_call.1} parent=1 // pred_check
      _
    $region63: #{tpu_custom_call.1} parent=1 // pred_check_branch
      %1061 = sbr.rel (0) target = $region65
    $region64: #{tpu_custom_call.1} parent=1 // pred_region
      _
    $region65: #{tpu_custom_call.1} parent=1 // pred_fallthru
      _
    %1062 = vsyncpa [#allocation3], 1
    %1063 = vsyncpa [#allocation5], 1

</llo_original>
